<compile_context>
chip_gen: v7x
topology: tpu7x:2x2x1
jax: 0.10.0
libtpu: 0.0.40
codegen_flags: <defaults>
</compile_context>

<pallas_src>
import functools

import jax
import jax.numpy as jnp
from jax.experimental import pallas as pl
from jax.experimental.pallas import tpu as pltpu

LANES = 128  # lane-dense width for in_dim / hidden / n_nodes


# --------------------------------------------------------------------------
# Kernel
# --------------------------------------------------------------------------
def _mlp_agent_kernel(x_ref, w_ref, b_ref, out_ref, *, n_nodes):
    # x_ref : (TB, 128) bf16  lanes [0,n_nodes) = additive mask (0 / -1e6),
    #                         lanes [n_nodes, n_nodes+in_dim) = o_t, rest = 0
    # w_ref : (3, 128, 128) bf16  padded W1 (rows shifted by n_nodes) / W2 / W3
    # b_ref : (8, 128) f32        rows 0/1/2 = padded b1 / b2 / b3
    x = x_ref[...]

    # Mask lanes hit all-zero rows of the padded W1, so this equals o_t @ W1.
    h1 = jnp.tanh(
        jnp.dot(x, w_ref[0], preferred_element_type=jnp.float32) + b_ref[0:1, :]
    )
    h2 = jnp.tanh(
        jnp.dot(h1.astype(jnp.bfloat16), w_ref[1],
                preferred_element_type=jnp.float32) + b_ref[1:2, :]
    )
    y = (jnp.dot(h2.astype(jnp.bfloat16), w_ref[2],
                 preferred_element_type=jnp.float32) + b_ref[2:3, :])

    # Rebuild the 128-lane additive mask: lanes [0,n_nodes) come straight from
    # the input row (0 or -1e6); every other lane is forced to -1e6 so the pad
    # lanes vanish from the softmax (exp underflows to exactly 0).
    lane = jax.lax.broadcasted_iota(jnp.int32, y.shape, 1)
    mask = jnp.where(lane < n_nodes, x.astype(jnp.float32), -1000000.0)
    y = y + mask

    # Numerically stable softmax over all 128 lanes, exact normalization.
    y_max = jnp.max(y, axis=-1, keepdims=True)
    e = jnp.exp(y - y_max)
    denom = jnp.sum(e, axis=-1, keepdims=True)
    out_ref[...] = (e * (1.0 / denom)).astype(out_ref.dtype)


def _pick_block_rows(batch, cap=1024):
    """Largest multiple-of-16 divisor of `batch` up to `cap`, preferring a tile
    that leaves >= 2 grid steps (v7x has two TensorCores to feed)."""
    assert batch % 16 == 0, "batch must be a multiple of 16 (bf16 sublane tile)"
    best = 16
    for tb in range(16, min(cap, batch) + 1, 16):
        if batch % tb == 0 and (batch // tb >= 2 or batch == 16):
            best = tb
    return best


@functools.partial(jax.jit, static_argnames=("n_nodes", "block_rows"))
def mlp_agent_forward(xm, wpack, bpack, *, n_nodes, block_rows=None):
    """Batched masked-softmax MLP forward.

    Returns the lane-dense (B, 128) probability buffer; the action
    distribution is lanes [0, n_nodes) (the remaining lanes are exact zeros).
    Consumers should index it directly instead of materializing a narrow copy.
    """
    B = xm.shape[0]
    assert xm.shape[1] == LANES and xm.dtype == jnp.bfloat16
    TB = block_rows if block_rows is not None else _pick_block_rows(B)
    assert B % TB == 0 and TB % 16 == 0

    kernel = functools.partial(_mlp_agent_kernel, n_nodes=n_nodes)
    return pl.pallas_call(
        kernel,
        out_shape=jax.ShapeDtypeStruct((B, LANES), jnp.float32),
        grid=(B // TB,),
        in_specs=[
            pl.BlockSpec((TB, LANES), lambda i: (i, 0)),           # o_t+mask tile
            pl.BlockSpec((3, LANES, LANES), lambda i: (0, 0, 0)),  # weights (resident)
            pl.BlockSpec((8, LANES), lambda i: (0, 0)),            # biases  (resident)
        ],
        out_specs=pl.BlockSpec((TB, LANES), lambda i: (i, 0)),
        compiler_params=pltpu.CompilerParams(
            dimension_semantics=("parallel",)),
    )(xm, wpack, bpack)


# --------------------------------------------------------------------------
# Parameter / input packing (plain JAX glue, mirrors the PyTorch forward())
# --------------------------------------------------------------------------
def init_params(key, n_nodes, hidden_dim):
    """PyTorch-style Linear init: U(-1/sqrt(fan_in), 1/sqrt(fan_in))."""
    in_dim = n_nodes * 2 + 4
    keys = jax.random.split(key, 6)

    def lin(kw, kb, fan_in, fan_out):
        bound = 1.0 / jnp.sqrt(float(fan_in))
        w = jax.random.uniform(kw, (fan_in, fan_out), jnp.float32, -bound, bound)
        b = jax.random.uniform(kb, (fan_out,), jnp.float32, -bound, bound)
        return w, b

    w1, b1 = lin(keys[0], keys[1], in_dim, hidden_dim)
    w2, b2 = lin(keys[2], keys[3], hidden_dim, hidden_dim)
    w3, b3 = lin(keys[4], keys[5], hidden_dim, n_nodes)
    return w1, b1, w2, b2, w3, b3


def pack_params(w1, b1, w2, b2, w3, b3):
    """Pad to 128 lanes, shift W1 rows by n_nodes (mask lanes), cast weights bf16."""
    in_dim, hidden = w1.shape
    n_nodes = w3.shape[1]
    assert n_nodes + in_dim <= LANES, "3*n_nodes + 4 must be <= 128"
    assert hidden <= LANES and n_nodes <= LANES

    wpack = jnp.zeros((3, LANES, LANES), jnp.float32)
    wpack = wpack.at[0, n_nodes:n_nodes + in_dim, :hidden].set(w1)  # rows shifted
    wpack = wpack.at[1, :hidden, :hidden].set(w2)
    wpack = wpack.at[2, :hidden, :n_nodes].set(w3)
    bpack = jnp.zeros((8, LANES), jnp.float32)
    bpack = bpack.at[0, :hidden].set(b1)
    bpack = bpack.at[1, :hidden].set(b2)
    bpack = bpack.at[2, :n_nodes].set(b3)
    return wpack.astype(jnp.bfloat16), bpack


def build_batch_inputs(nodes, visited_idx, n_nodes):
    """Vectorized version of the PyTorch forward() glue for B environments.

    nodes:       (B, 2, n_nodes) xy coordinates (O_matrix per env).
    visited_idx: (B, nv) int32 visited node indices; column 0 = first node,
                 last column = current node.  (The module's empty-`visited`
                 branch corresponds to passing first/current coords of -1.)
    Returns (o_t, mask, xm): unpadded o_t / mask for the reference, plus the
    packed bf16 kernel input xm (B, 128): mask in lanes [0, n_nodes),
    o_t in lanes [n_nodes, n_nodes+in_dim), zeros elsewhere.
    """
    B = nodes.shape[0]
    in_dim = n_nodes * 2 + 4

    # O_matrix.T.flatten() per env -> interleaved [x0, y0, x1, y1, ...]
    flat = jnp.transpose(nodes, (0, 2, 1)).reshape(B, n_nodes * 2)
    b_idx = jnp.arange(B)
    first = nodes[b_idx, :, visited_idx[:, 0]]      # (B, 2)
    current = nodes[b_idx, :, visited_idx[:, -1]]   # (B, 2)
    o_t = jnp.concatenate([flat, first, current], axis=1)  # (B, in_dim)

    # mu_t: -1e6 on visited nodes, 0 elsewhere.
    onehot = jax.nn.one_hot(visited_idx, n_nodes, dtype=jnp.float32)
    visited_any = (jnp.sum(onehot, axis=1) > 0).astype(jnp.float32)
    mask = visited_any * (-1000000.0)

    xm = jnp.zeros((B, LANES), jnp.float32)
    xm = xm.at[:, :n_nodes].set(mask)
    xm = xm.at[:, n_nodes:n_nodes + in_dim].set(o_t)
    return o_t, mask, xm.astype(jnp.bfloat16)


# --------------------------------------------------------------------------
# Demo / self-check
# --------------------------------------------------------------------------
if __name__ == "__main__":
    n_nodes = 8
    hidden_dim = 64
    B = 512  # batched environments; wrapper picks a 256-row tile -> 2 grid steps

    key = jax.random.PRNGKey(0)
    k_params, k_nodes = jax.random.split(key)

    w1, b1, w2, b2, w3, b3 = init_params(k_params, n_nodes, hidden_dim)
    wpack, bpack = pack_params(w1, b1, w2, b2, w3, b3)

    # Synthetic batch of environment states: coordinates + 2 visited nodes each.
    nodes = jax.random.uniform(k_nodes, (B, 2, n_nodes), jnp.float32)
    s = jnp.arange(B, dtype=jnp.int32)
    visited_idx = jnp.stack([s % n_nodes, (3 * s + 1) % n_nodes], axis=1)

    o_t, mask, xm = build_batch_inputs(nodes, visited_idx, n_nodes)

    pi_full = mlp_agent_forward(xm, wpack, bpack, n_nodes=n_nodes)
    pi_full = jax.block_until_ready(pi_full)
    assert pi_full.shape == (B, LANES)

    # ---- correctness checks (test glue only: the narrow slice below is NOT
    # ---- part of the hot path; consumers index the lane-dense buffer).
    pi = pi_full[:, :n_nodes]

    def q(a):  # quantize to the kernel's bf16 storage, math in f32
        return a.astype(jnp.bfloat16).astype(jnp.float32)

    h1 = jnp.tanh(q(o_t) @ q(w1) + b1)
    h2 = jnp.tanh(q(h1) @ q(w2) + b2)
    ref = jax.nn.softmax(q(h2) @ q(w3) + b3 + mask, axis=-1)

    assert jnp.allclose(jnp.sum(pi_full, axis=-1), 1.0, atol=1e-4)
    assert float(jnp.max(jnp.abs(pi - ref))) < 5e-3
    assert float(jnp.max(pi_full[:, n_nodes:])) < 1e-6        # pad lanes ~ 0
    bsel = jnp.arange(B)
    assert float(jnp.max(pi[bsel, visited_idx[:, 0]])) < 1e-6  # visited masked
    assert float(jnp.max(pi[bsel, visited_idx[:, 1]])) < 1e-6

    print("KERNEL_OK")
</pallas_src>

<mosaic_0001>
module attributes {stable_mosaic.version = 11 : i64} {
  func.func @_mlp_agent_kernel(%arg0: i32, %arg1: memref<256x128xbf16, #tpu.memory_space<vmem>>, %arg2: memref<3x128x128xbf16, #tpu.memory_space<vmem>>, %arg3: memref<8x128xf32, #tpu.memory_space<vmem>>, %arg4: memref<256x128xf32, #tpu.memory_space<vmem>>) attributes {dimension_semantics = [#tpu.dimension_semantics<parallel>], iteration_bounds = array<i64: 2>, scalar_prefetch = 0 : i64, scratch_operands = 0 : i64, tpu.core_type = #tpu.core_type<tc>, window_params = [{transform_indices = @transform_0, window_bounds = array<i64: 256, 128>}, {pipeline_mode = #tpu.pipeline_mode<synchronous>, transform_indices = @transform_1, window_bounds = array<i64: 3, 128, 128>}, {pipeline_mode = #tpu.pipeline_mode<synchronous>, transform_indices = @transform_2, window_bounds = array<i64: 8, 128>}, {transform_indices = @transform_3, window_bounds = array<i64: 256, 128>}]} {
    %c0 = arith.constant 0 : index
    %c0_0 = arith.constant 0 : index
    %0 = vector.load %arg1[%c0, %c0_0] : memref<256x128xbf16, #tpu.memory_space<vmem>>, vector<256x128xbf16>
    %c0_1 = arith.constant 0 : index
    %c0_2 = arith.constant 0 : index
    %c0_3 = arith.constant 0 : index
    %1 = vector.load %arg2[%c0_1, %c0_2, %c0_3] : memref<3x128x128xbf16, #tpu.memory_space<vmem>>, vector<1x128x128xbf16>
    %2 = vector.shape_cast %1 : vector<1x128x128xbf16> to vector<128x128xbf16>
    %cst = arith.constant dense<0.000000e+00> : vector<256x128xf32>
    %3 = tpu.matmul %0, %2, %cst {dimension_numbers = #tpu.dot_dimension_numbers<[1], [0], [0], [1], [0, 0, 1, 1], [], []>} : vector<256x128xbf16>, vector<128x128xbf16>, vector<256x128xf32> -> vector<256x128xf32>
    %c0_4 = arith.constant 0 : index
    %c0_5 = arith.constant 0 : index
    %4 = vector.load %arg3[%c0_4, %c0_5] : memref<8x128xf32, #tpu.memory_space<vmem>>, vector<1x128xf32>
    %5 = vector.broadcast %4 : vector<1x128xf32> to vector<256x128xf32>
    %6 = arith.addf %3, %5 : vector<256x128xf32>
    %7 = math.tanh %6 : vector<256x128xf32>
    %8 = arith.truncf %7 : vector<256x128xf32> to vector<256x128xbf16>
    %c1 = arith.constant 1 : index
    %c0_6 = arith.constant 0 : index
    %c0_7 = arith.constant 0 : index
    %9 = vector.load %arg2[%c1, %c0_6, %c0_7] : memref<3x128x128xbf16, #tpu.memory_space<vmem>>, vector<1x128x128xbf16>
    %10 = vector.shape_cast %9 : vector<1x128x128xbf16> to vector<128x128xbf16>
    %cst_8 = arith.constant dense<0.000000e+00> : vector<256x128xf32>
    %11 = tpu.matmul %8, %10, %cst_8 {dimension_numbers = #tpu.dot_dimension_numbers<[1], [0], [0], [1], [0, 0, 1, 1], [], []>} : vector<256x128xbf16>, vector<128x128xbf16>, vector<256x128xf32> -> vector<256x128xf32>
    %c1_9 = arith.constant 1 : index
    %c0_10 = arith.constant 0 : index
    %12 = vector.load %arg3[%c1_9, %c0_10] : memref<8x128xf32, #tpu.memory_space<vmem>>, vector<1x128xf32>
    %13 = vector.broadcast %12 : vector<1x128xf32> to vector<256x128xf32>
    %14 = arith.addf %11, %13 : vector<256x128xf32>
    %15 = math.tanh %14 : vector<256x128xf32>
    %16 = arith.truncf %15 : vector<256x128xf32> to vector<256x128xbf16>
    %c2 = arith.constant 2 : index
    %c0_11 = arith.constant 0 : index
    %c0_12 = arith.constant 0 : index
    %17 = vector.load %arg2[%c2, %c0_11, %c0_12] : memref<3x128x128xbf16, #tpu.memory_space<vmem>>, vector<1x128x128xbf16>
    %18 = vector.shape_cast %17 : vector<1x128x128xbf16> to vector<128x128xbf16>
    %cst_13 = arith.constant dense<0.000000e+00> : vector<256x128xf32>
    %19 = tpu.matmul %16, %18, %cst_13 {dimension_numbers = #tpu.dot_dimension_numbers<[1], [0], [0], [1], [0, 0, 1, 1], [], []>} : vector<256x128xbf16>, vector<128x128xbf16>, vector<256x128xf32> -> vector<256x128xf32>
    %c2_14 = arith.constant 2 : index
    %c0_15 = arith.constant 0 : index
    %20 = vector.load %arg3[%c2_14, %c0_15] : memref<8x128xf32, #tpu.memory_space<vmem>>, vector<1x128xf32>
    %21 = vector.broadcast %20 : vector<1x128xf32> to vector<256x128xf32>
    %22 = arith.addf %19, %21 : vector<256x128xf32>
    %23 = tpu.iota {dimensions = array<i32: 1>} : vector<256x128xi32>
    %c8_i32 = arith.constant 8 : i32
    %24 = vector.broadcast %c8_i32 : i32 to vector<256x128xi32>
    %25 = arith.cmpi slt, %23, %24 : vector<256x128xi32>
    %26 = arith.extf %0 : vector<256x128xbf16> to vector<256x128xf32>
    %cst_16 = arith.constant -1.000000e+06 : f32
    %27 = vector.broadcast %cst_16 : f32 to vector<256x128xf32>
    %28 = arith.select %25, %26, %27 : vector<256x128xi1>, vector<256x128xf32>
    %29 = arith.addf %22, %28 : vector<256x128xf32>
    %cst_17 = arith.constant dense<0xFF800000> : vector<256xf32>
    %30 = vector.multi_reduction <maximumf>, %29, %cst_17 [1] : vector<256x128xf32> to vector<256xf32>
    %31 = vector.shape_cast %30 : vector<256xf32> to vector<256x1xf32>
    %32 = vector.broadcast %31 : vector<256x1xf32> to vector<256x128xf32>
    %33 = arith.subf %29, %32 : vector<256x128xf32>
    %34 = math.exp %33 : vector<256x128xf32>
    %cst_18 = arith.constant dense<0.000000e+00> : vector<256xf32>
    %35 = vector.multi_reduction <add>, %34, %cst_18 [1] : vector<256x128xf32> to vector<256xf32>
    %36 = vector.shape_cast %35 : vector<256xf32> to vector<256x1xf32>
    %cst_19 = arith.constant 1.000000e+00 : f32
    %37 = vector.broadcast %cst_19 : f32 to vector<256x1xf32>
    %38 = arith.divf %37, %36 : vector<256x1xf32>
    %39 = vector.broadcast %38 : vector<256x1xf32> to vector<256x128xf32>
    %40 = arith.mulf %34, %39 : vector<256x128xf32>
    %c0_20 = arith.constant 0 : index
    %c0_21 = arith.constant 0 : index
    %41 = vector.load %arg4[%c0_20, %c0_21] : memref<256x128xf32, #tpu.memory_space<vmem>>, vector<256x128xf32>
    tpu.vector_store %arg4[%c0_20, %c0_21], %40 {strides = array<i32>} : memref<256x128xf32, #tpu.memory_space<vmem>>, vector<256x128xf32>,
    return
  }
  func.func @transform_0(%arg0: i32) -> (i32, i32) {
    %c0_i32 = arith.constant 0 : i32
    %c0_i32_0 = arith.constant 0 : i32
    return %arg0, %c0_i32 : i32, i32
  }
  func.func @transform_1(%arg0: i32) -> (i32, i32, i32) {
    %c0_i32 = arith.constant 0 : i32
    %c0_i32_0 = arith.constant 0 : i32
    %c0_i32_1 = arith.constant 0 : i32
    %c0_i32_2 = arith.constant 0 : i32
    return %c0_i32, %c0_i32_0, %c0_i32_1 : i32, i32, i32
  }
  func.func @transform_2(%arg0: i32) -> (i32, i32) {
    %c0_i32 = arith.constant 0 : i32
    %c0_i32_0 = arith.constant 0 : i32
    %c0_i32_1 = arith.constant 0 : i32
    return %c0_i32, %c0_i32_0 : i32, i32
  }
  func.func @transform_3(%arg0: i32) -> (i32, i32) {
    %c0_i32 = arith.constant 0 : i32
    %c0_i32_0 = arith.constant 0 : i32
    return %arg0, %c0_i32 : i32, i32
  }
}

</mosaic_0001>

<llo_original>
// kernel: mlp_agent_forward.1
$region0: #{mlp_agent_forward.1}
  #allocation0 [shape = 'u32[]', space=smem, size = 0x4, offset = 0x4, fixed_abs, tag = 'smem constant byte address 0x4 - core index']
  #allocation1 [shape = 'u32[144,128]{1,0:T(1,128)}', space=vmem, size = 0x12000, scoped, tag = 'internal scratch']
  %s0 = inlined_call_operand.hbm [shape: bf16[512,128], index: 0, kind: input, shape index: {}]
  %s1 = inlined_call_operand.hbm [shape: bf16[3,128,128], index: 1, kind: input, shape index: {}]
  %s2 = inlined_call_operand.hbm [shape: f32[8,128], index: 2, kind: input, shape index: {}]
  %s3 = inlined_call_operand.hbm [shape: f32[512,128], index: 3, kind: output, shape index: {}]
  %s4 = sld [smem:[#allocation0]]
  $region57: #{mlp_agent_forward.1} parent=0
    _
  %s6 = ssub.s32 1, %s4
  %s7 = scalar_select 0, %s6, %s4
  $region1: #{mlp_agent_forward.1} parent=0
    #allocation2 [shape = 'u8[131072]{0}', space=vmem, size = 0x20000, scoped, tag = 'input window, operand 0']
    #allocation3 [shape = 's32[2]{0}', space=sflag, size = 0x8, scoped, tag = 'scoped memory for mlp_agent_forward.1']
    #allocation4 [shape = 's32[2]{0}', space=sflag, size = 0x8, scoped, tag = 'scoped memory for mlp_agent_forward.1']
    #allocation5 [shape = 'u8[98304]{0}', space=vmem, size = 0x18000, scoped, tag = 'input window, operand 1, single buffered']
    #allocation6 [shape = 's32[1]{0}', space=sflag, size = 0x4, scoped, tag = 'scoped memory for mlp_agent_forward.1']
    #allocation7 [shape = 'u8[4096]{0}', space=vmem, size = 0x1000, scoped, tag = 'input window, operand 2, single buffered']
    #allocation8 [shape = 'u8[262144]{0}', space=vmem, size = 0x40000, scoped, tag = 'output window, operand 0']
    %8 = vsyncpa [#allocation3], 0
    %s9 = scalar_lea.sflag [#allocation3], 1
    %10 = vsyncpa %s9, 0
    %11 = vsyncpa [#allocation6], 0
    %12 = vsyncpa [#allocation4], 0
    %s13 = scalar_lea.sflag [#allocation4], 1
    %14 = vsyncpa %s13, 0
    loop: start=0, step=1, limit=4
    $region2: #{mlp_agent_forward.1} parent=1 // loop_pre_header
      _
    $region3: #{mlp_agent_forward.1} parent=1 // loop_header
      %s16 = sphi 0, %s20
      %p17 = scmp.ge.s32.totalorder %s16, 4
      %s26 = sphi 0, %s28
      %s29 = sphi 0, %s26
      %s30 = sphi 0, %s29
      %s46 = sphi 0, %s30
      %s50 = sphi 0, %s50
      %s52 = sphi 0, %s50
      %s53 = sphi 0, %s52
      %s67 = sphi 0, %s53
      %s71 = sphi 0, %s71
      %s73 = sphi 0, %s71
      %s74 = sphi 0, %s73
      %s88 = sphi 0, %s74
      %s94 = sphi 0, %s96
      %s97 = sphi 0, %s94
      %s98 = sphi 0, %s97
      %s114 = sphi 0, %s98
    $region4: #{mlp_agent_forward.1} parent=1 // loop_header_branch
      %19 = sbr.rel (%p17) target = $region8
    $region5: #{mlp_agent_forward.1} parent=1 // loop_body
      %s21 = ssub.s32 %s16, 1
      %s22 = ssub.s32 %s16, 2
      %s23 = sadd.s32 %s16, 1
      %s24 = ssub.s32 %s16, %s23
      %p25 = scmp.eq.s32.totalorder %s24, 0
      %s27 = sadd.s32 %s26, 1
      %s28 = scalar_select %p25, %s26, %s27
      %p31 = pneg %p25
      %p32 = scmp.eq.s32.totalorder %s16, 1
      %p33 = por %p31, %p32
      %p34 = scmp.ne.s32.totalorder %s26, %s29
      %p35 = scmp.eq.s32.totalorder %s16, 0
      %p36 = por %p34, %p35
      %p37 = scmp.ne.s32.totalorder %s26, %s29
      %p38 = scmp.eq.s32.totalorder %s21, 1
      %p39 = por %p37, %p38
      %p40 = scmp.ne.s32.totalorder %s29, %s30
      %p41 = scmp.eq.s32.totalorder %s21, 0
      %p42 = por %p40, %p41
      %p43 = scmp.ne.s32.totalorder %s29, %s30
      %p44 = scmp.eq.s32.totalorder %s22, 1
      %p45 = por %p43, %p44
      %p47 = scmp.ne.s32.totalorder %s30, %s46
      %p48 = scmp.eq.s32.totalorder %s22, 0
      %p49 = por %p47, %p48
      %s51 = sadd.s32 %s50, 1
      %p54 = scmp.eq.s32.totalorder %s16, 1
      %p55 = scmp.ne.s32.totalorder %s50, %s52
      %p56 = scmp.eq.s32.totalorder %s16, 0
      %p57 = por %p55, %p56
      %p58 = scmp.ne.s32.totalorder %s50, %s52
      %p59 = scmp.eq.s32.totalorder %s21, 1
      %p60 = por %p58, %p59
      %p61 = scmp.ne.s32.totalorder %s52, %s53
      %p62 = scmp.eq.s32.totalorder %s21, 0
      %p63 = por %p61, %p62
      %p64 = scmp.ne.s32.totalorder %s52, %s53
      %p65 = scmp.eq.s32.totalorder %s22, 1
      %p66 = por %p64, %p65
      %p68 = scmp.ne.s32.totalorder %s53, %s67
      %p69 = scmp.eq.s32.totalorder %s22, 0
      %p70 = por %p68, %p69
      %s72 = sadd.s32 %s71, 1
      %p75 = scmp.eq.s32.totalorder %s16, 1
      %p76 = scmp.ne.s32.totalorder %s71, %s73
      %p77 = scmp.eq.s32.totalorder %s16, 0
      %p78 = por %p76, %p77
      %p79 = scmp.ne.s32.totalorder %s71, %s73
      %p80 = scmp.eq.s32.totalorder %s21, 1
      %p81 = por %p79, %p80
      %p82 = scmp.ne.s32.totalorder %s73, %s74
      %p83 = scmp.eq.s32.totalorder %s21, 0
      %p84 = por %p82, %p83
      %p85 = scmp.ne.s32.totalorder %s73, %s74
      %p86 = scmp.eq.s32.totalorder %s22, 1
      %p87 = por %p85, %p86
      %p89 = scmp.ne.s32.totalorder %s74, %s88
      %p90 = scmp.eq.s32.totalorder %s22, 0
      %p91 = por %p89, %p90
      %s92 = ssub.s32 %s16, %s23
      %p93 = scmp.eq.s32.totalorder %s92, 0
      %s95 = sadd.s32 %s94, 1
      %s96 = scalar_select %p93, %s94, %s95
      %p99 = pneg %p93
      %p100 = scmp.eq.s32.totalorder %s16, 1
      %p101 = por %p99, %p100
      %p102 = scmp.ne.s32.totalorder %s94, %s97
      %p103 = scmp.eq.s32.totalorder %s16, 0
      %p104 = por %p102, %p103
      %p105 = scmp.ne.s32.totalorder %s94, %s97
      %p106 = scmp.eq.s32.totalorder %s21, 1
      %p107 = por %p105, %p106
      %p108 = scmp.ne.s32.totalorder %s97, %s98
      %p109 = scmp.eq.s32.totalorder %s21, 0
      %p110 = por %p108, %p109
      %p111 = scmp.ne.s32.totalorder %s97, %s98
      %p112 = scmp.eq.s32.totalorder %s22, 1
      %p113 = por %p111, %p112
      %p115 = scmp.ne.s32.totalorder %s98, %s114
      %p116 = scmp.eq.s32.totalorder %s22, 0
      %p117 = por %p115, %p116
      %p118 = scmp.le.s32.totalorder 1, %s16
      %p119 = scmp.lt.s32.totalorder %s16, 3
      %p120 = pnand %p118, %p119
      %p121 = pneg %p120
      // Predicated region
      $region9: #{mlp_agent_forward.1} parent=5 // pred_check
        _
      $region10: #{mlp_agent_forward.1} parent=5 // pred_check_branch
        %123 = sbr.rel (%p120) target = $region12
      $region11: #{mlp_agent_forward.1} parent=5 // pred_region
        %s124 = ssub.s32 %s16, 1
        // Predicated region
        $region13: #{mlp_agent_forward.1} parent=11 // pred_check
          %p125 = pneg %p63
        $region14: #{mlp_agent_forward.1} parent=11 // pred_check_branch
          %127 = sbr.rel (%p125) target = $region16
        $region15: #{mlp_agent_forward.1} parent=11 // pred_region
          %s129 = ssub.s32 3072, 3072
          %130 = vsyncadd [#allocation6], %s129
          %s131 = sshll.u32 [#allocation5], 4
          %s132 = int_to_ptr.vmem [resolvable:$true] %s131
          %137 = dma.hbm_to_vmem [thread:$0]  %s1, 3072, %s132, [#allocation6], 64, 64, 4
        $region16: #{mlp_agent_forward.1} parent=11 // pred_fallthru
          _
        // Predicated region
        $region17: #{mlp_agent_forward.1} parent=11 // pred_check
          %p138 = pneg %p84
        $region18: #{mlp_agent_forward.1} parent=11 // pred_check_branch
          %140 = sbr.rel (%p138) target = $region20
        $region19: #{mlp_agent_forward.1} parent=11 // pred_region
          %s142 = ssub.s32 128, 128
          %143 = vsyncadd [#allocation6], %s142
          %s145 = sshll.u32 [#allocation7], 4
          %s146 = int_to_ptr.vmem [resolvable:$true] %s145
          %148 = dma.hbm_to_vmem [thread:$0]  %s2, 128, %s146, [#allocation6]
        $region20: #{mlp_agent_forward.1} parent=11 // pred_fallthru
          _
      $region12: #{mlp_agent_forward.1} parent=5 // pred_fallthru
        _
      %p149 = scmp.lt.s32.totalorder %s16, 2
      // Predicated region
      $region21: #{mlp_agent_forward.1} parent=5 // pred_check
        %p150 = pneg %p149
      $region22: #{mlp_agent_forward.1} parent=5 // pred_check_branch
        %152 = sbr.rel (%p150) target = $region24
      $region23: #{mlp_agent_forward.1} parent=5 // pred_region
        // Predicated region
        $region25: #{mlp_agent_forward.1} parent=23 // pred_check
          %p153 = pneg %p36
        $region26: #{mlp_agent_forward.1} parent=23 // pred_check_branch
          %155 = sbr.rel (%p153) target = $region28
        $region27: #{mlp_agent_forward.1} parent=23 // pred_region
          %s156 = sand.u32 %s26, 1
          %s157 = scalar_lea.sflag [#allocation3], %s156
          %s158 = sand.u32 %s26, 1
          %s159 = smul.addr %s158, 128
          %s160 = scalar_lea.vmem [#allocation2], %s159
          %s161 = smul.u32 32, %s16
          %s163 = ssub.s32 2048, 2048
          %164 = vsyncadd %s157, %s163
          %s165 = smul.addr %s161, 64
          %s166 = scalar_lea.hbm %s0, %s165
          %s167 = sshll.u32 %s160, 4
          %s168 = int_to_ptr.vmem [resolvable:$true] %s167
          %173 = dma.hbm_to_vmem [thread:$0]  %s166, 2048, %s168, %s157, 64, 64, 4
        $region28: #{mlp_agent_forward.1} parent=23 // pred_fallthru
          _
      $region24: #{mlp_agent_forward.1} parent=5 // pred_fallthru
        _
      %p174 = scmp.le.s32.totalorder 1, %s16
      %p175 = scmp.lt.s32.totalorder %s16, 3
      %p176 = pnand %p174, %p175
      %p177 = pneg %p176
      // Predicated region
      $region29: #{mlp_agent_forward.1} parent=5 // pred_check
        _
      $region30: #{mlp_agent_forward.1} parent=5 // pred_check_branch
        %179 = sbr.rel (%p176) target = $region32
      $region31: #{mlp_agent_forward.1} parent=5 // pred_region
        %s180 = ssub.s32 %s16, 1
        %s181 = sand.u32 %s29, 1
        %s182 = scalar_lea.sflag [#allocation3], %s181
        %s183 = sand.u32 %s29, 1
        %s184 = smul.addr %s183, 128
        %s185 = scalar_lea.vmem [#allocation2], %s184
        // Predicated region
        $region33: #{mlp_agent_forward.1} parent=31 // pred_check
          %p186 = pneg %p42
        $region34: #{mlp_agent_forward.1} parent=31 // pred_check_branch
          %188 = sbr.rel (%p186) target = $region36
        $region35: #{mlp_agent_forward.1} parent=31 // pred_region
          %189 = dma.done %s182, 2048
        $region36: #{mlp_agent_forward.1} parent=31 // pred_fallthru
          _
        // Predicated region
        $region37: #{mlp_agent_forward.1} parent=31 // pred_check
          %p190 = pneg %p63
        $region38: #{mlp_agent_forward.1} parent=31 // pred_check_branch
          %192 = sbr.rel (%p190) target = $region40
        $region39: #{mlp_agent_forward.1} parent=31 // pred_region
          %193 = dma.done [#allocation6], 3072
        $region40: #{mlp_agent_forward.1} parent=31 // pred_fallthru
          _
        // Predicated region
        $region41: #{mlp_agent_forward.1} parent=31 // pred_check
          %p194 = pneg %p84
        $region42: #{mlp_agent_forward.1} parent=31 // pred_check_branch
          %196 = sbr.rel (%p194) target = $region44
        $region43: #{mlp_agent_forward.1} parent=31 // pred_region
          %197 = dma.done [#allocation6], 128
        $region44: #{mlp_agent_forward.1} parent=31 // pred_fallthru
          _
        %s198 = sand.u32 %s29, 1
        %s199 = scalar_lea.sflag [#allocation3], %s198
        %s200 = sand.u32 %s29, 1
        %s201 = smul.addr %s200, 128
        %s202 = scalar_lea.vmem [#allocation2], %s201
        %p203 = pneg %p42
        %p204 = pneg %p39
        %p205 = pneg %p63
        %p206 = pneg %p60
        %p207 = pneg %p84
        %p208 = pneg %p81
        %p209 = pneg %p110
        %p210 = pneg %p107
        %s211 = sand.u32 %s97, 1
        %s212 = scalar_lea.sflag [#allocation4], %s211
        %s213 = sand.u32 %s97, 1
        %s214 = smul.addr %s213, 256
        %s215 = scalar_lea.vmem [#allocation8], %s214
        %s216 = smul.u32 32, %s21
        %s217 = smul.u32 32, %s21
        %v219 = vld [vmem:[%s185] sm:$0xf]
        %v220 = vld [vmem:[%s185 + $0x4] sm:$0xf]
        %v221 = vld [vmem:[%s185 + $0x8] sm:$0xf]
        %v222 = vld [vmem:[%s185 + $0xc] sm:$0xf]
        %v223 = vld [vmem:[%s185 + $0x10] sm:$0xf]
        %v224 = vld [vmem:[%s185 + $0x14] sm:$0xf]
        %v225 = vld [vmem:[%s185 + $0x18] sm:$0xf]
        %v226 = vld [vmem:[%s185 + $0x1c] sm:$0xf]
        %v227 = vld [vmem:[%s185 + $0x20] sm:$0xf]
        %v228 = vld [vmem:[%s185 + $0x24] sm:$0xf]
        %v229 = vld [vmem:[%s185 + $0x28] sm:$0xf]
        %v230 = vld [vmem:[%s185 + $0x2c] sm:$0xf]
        %v231 = vld [vmem:[%s185 + $0x30] sm:$0xf]
        %v232 = vld [vmem:[%s185 + $0x34] sm:$0xf]
        %v233 = vld [vmem:[%s185 + $0x38] sm:$0xf]
        %v234 = vld [vmem:[%s185 + $0x3c] sm:$0xf]
        %v235 = vld [vmem:[%s185 + $0x40] sm:$0xf]
        %v236 = vld [vmem:[%s185 + $0x44] sm:$0xf]
        %v237 = vld [vmem:[%s185 + $0x48] sm:$0xf]
        %v238 = vld [vmem:[%s185 + $0x4c] sm:$0xf]
        %v239 = vld [vmem:[%s185 + $0x50] sm:$0xf]
        %v240 = vld [vmem:[%s185 + $0x54] sm:$0xf]
        %v241 = vld [vmem:[%s185 + $0x58] sm:$0xf]
        %v242 = vld [vmem:[%s185 + $0x5c] sm:$0xf]
        %v243 = vld [vmem:[%s185 + $0x60] sm:$0xf]
        %v244 = vld [vmem:[%s185 + $0x64] sm:$0xf]
        %v245 = vld [vmem:[%s185 + $0x68] sm:$0xf]
        %v246 = vld [vmem:[%s185 + $0x6c] sm:$0xf]
        %v247 = vld [vmem:[%s185 + $0x70] sm:$0xf]
        %v248 = vld [vmem:[%s185 + $0x74] sm:$0xf]
        %v249 = vld [vmem:[%s185 + $0x78] sm:$0xf]
        %v250 = vld [vmem:[%s185 + $0x7c] sm:$0xf]
        %v251 = vld [vmem:[#allocation5] sm:$0xf]
        %v252 = vld [vmem:[#allocation5 + $0x4] sm:$0xf]
        %v253 = vld [vmem:[#allocation5 + $0x8] sm:$0xf]
        %v254 = vld [vmem:[#allocation5 + $0xc] sm:$0xf]
        %v255 = vld [vmem:[#allocation5 + $0x10] sm:$0xf]
        %v256 = vld [vmem:[#allocation5 + $0x14] sm:$0xf]
        %v257 = vld [vmem:[#allocation5 + $0x18] sm:$0xf]
        %v258 = vld [vmem:[#allocation5 + $0x1c] sm:$0xf]
        %v259 = vld [vmem:[#allocation5 + $0x20] sm:$0xf]
        %v260 = vld [vmem:[#allocation5 + $0x24] sm:$0xf]
        %v261 = vld [vmem:[#allocation5 + $0x28] sm:$0xf]
        %v262 = vld [vmem:[#allocation5 + $0x2c] sm:$0xf]
        %v263 = vld [vmem:[#allocation5 + $0x30] sm:$0xf]
        %v264 = vld [vmem:[#allocation5 + $0x34] sm:$0xf]
        %v265 = vld [vmem:[#allocation5 + $0x38] sm:$0xf]
        %v266 = vld [vmem:[#allocation5 + $0x3c] sm:$0xf]
        %v267 = vld [vmem:[#allocation7] sm:$0x1]
        %v268 = vlaneseq
        %v269 = vshrl.u32 %v268, 7
        %v270 = vsub.s32 0, %v269
        %v271 = vrot.slane %v267, %v270
        %v304 = vunpack.c.l.b16 %v219
        %v305 = vunpack.c.l.b16 %v220
        %v306 = vunpack.c.l.b16 %v221
        %v307 = vunpack.c.l.b16 %v222
        %v308 = vunpack.c.l.b16 %v223
        %v309 = vunpack.c.l.b16 %v224
        %v310 = vunpack.c.l.b16 %v225
        %v311 = vunpack.c.l.b16 %v226
        %v312 = vunpack.c.l.b16 %v227
        %v313 = vunpack.c.l.b16 %v228
        %v314 = vunpack.c.l.b16 %v229
        %v315 = vunpack.c.l.b16 %v230
        %v316 = vunpack.c.l.b16 %v231
        %v317 = vunpack.c.l.b16 %v232
        %v318 = vunpack.c.l.b16 %v233
        %v319 = vunpack.c.l.b16 %v234
        %v320 = vunpack.c.l.b16 %v235
        %v321 = vunpack.c.l.b16 %v236
        %v322 = vunpack.c.l.b16 %v237
        %v323 = vunpack.c.l.b16 %v238
        %v324 = vunpack.c.l.b16 %v239
        %v325 = vunpack.c.l.b16 %v240
        %v326 = vunpack.c.l.b16 %v241
        %v327 = vunpack.c.l.b16 %v242
        %v328 = vunpack.c.l.b16 %v243
        %v329 = vunpack.c.l.b16 %v244
        %v330 = vunpack.c.l.b16 %v245
        %v331 = vunpack.c.l.b16 %v246
        %v332 = vunpack.c.l.b16 %v247
        %v333 = vunpack.c.l.b16 %v248
        %v334 = vunpack.c.l.b16 %v249
        %v335 = vunpack.c.l.b16 %v250
        %v336 = vpack.c.b16 %v305, %v304
        %v337 = vpack.c.b16 %v307, %v306
        %v338 = vpack.c.b16 %v309, %v308
        %v339 = vpack.c.b16 %v311, %v310
        %v340 = vpack.c.b16 %v313, %v312
        %v341 = vpack.c.b16 %v315, %v314
        %v342 = vpack.c.b16 %v317, %v316
        %v343 = vpack.c.b16 %v319, %v318
        %v344 = vpack.c.b16 %v321, %v320
        %v345 = vpack.c.b16 %v323, %v322
        %v346 = vpack.c.b16 %v325, %v324
        %v347 = vpack.c.b16 %v327, %v326
        %v348 = vpack.c.b16 %v329, %v328
        %v349 = vpack.c.b16 %v331, %v330
        %v350 = vpack.c.b16 %v333, %v332
        %v351 = vpack.c.b16 %v335, %v334
        %v384 = vunpack.c.l.b16 %v251
        %v385 = vunpack.c.l.b16 %v252
        %v386 = vunpack.c.l.b16 %v253
        %v387 = vunpack.c.l.b16 %v254
        %v388 = vunpack.c.l.b16 %v255
        %v389 = vunpack.c.l.b16 %v256
        %v390 = vunpack.c.l.b16 %v257
        %v391 = vunpack.c.l.b16 %v258
        %v392 = vunpack.c.l.b16 %v259
        %v393 = vunpack.c.l.b16 %v260
        %v394 = vunpack.c.l.b16 %v261
        %v395 = vunpack.c.l.b16 %v262
        %v396 = vunpack.c.l.b16 %v263
        %v397 = vunpack.c.l.b16 %v264
        %v398 = vunpack.c.l.b16 %v265
        %v399 = vunpack.c.l.b16 %v266
        %v400 = vpack.c.b16 %v385, %v384
        %v401 = vpack.c.b16 %v387, %v386
        %v402 = vpack.c.b16 %v389, %v388
        %v403 = vpack.c.b16 %v391, %v390
        %v404 = vpack.c.b16 %v393, %v392
        %v405 = vpack.c.b16 %v395, %v394
        %v406 = vpack.c.b16 %v397, %v396
        %v407 = vpack.c.b16 %v399, %v398
        %416 = vmatprep.subr.bf16.mxu0 0
        %417 = vmatpush1.bf16.msra.mxu0 %v400
        %418 = vmatprep.subr.bf16.mxu0 0
        %419 = vmatpush1.bf16.msra.mxu0 %v401
        %420 = vmatprep.subr.bf16.mxu0 0
        %421 = vmatpush1.bf16.msra.mxu0 %v402
        %422 = vmatprep.subr.bf16.mxu0 0
        %423 = vmatpush1.bf16.msra.mxu0 %v403
        %424 = vmatprep.subr.bf16.mxu0 0
        %425 = vmatpush1.bf16.msra.mxu0 %v404
        %426 = vmatprep.subr.bf16.mxu0 0
        %427 = vmatpush1.bf16.msra.mxu0 %v405
        %428 = vmatprep.subr.bf16.mxu0 0
        %429 = vmatpush1.bf16.msra.mxu0 %v406
        %430 = vmatprep.subr.bf16.mxu0 0
        %431 = vmatpush1.bf16.msra.mxu0 %v407
        %432 = vmatprep.subr.bf16.mxu0 0
        %433 = vmatpush1.bf16.msra.mxu0 0
        %434 = vmatprep.subr.bf16.mxu0 0
        %435 = vmatpush1.bf16.msra.mxu0 0
        %436 = vmatprep.subr.bf16.mxu0 0
        %437 = vmatpush1.bf16.msra.mxu0 0
        %438 = vmatprep.subr.bf16.mxu0 0
        %439 = vmatpush1.bf16.msra.mxu0 0
        %440 = vmatprep.subr.bf16.mxu0 0
        %441 = vmatpush1.bf16.msra.mxu0 0
        %442 = vmatprep.subr.bf16.mxu0 0
        %443 = vmatpush1.bf16.msra.mxu0 0
        %444 = vmatprep.subr.bf16.mxu0 0
        %445 = vmatpush1.bf16.msra.mxu0 0
        %446 = vmatprep.subr.bf16.mxu0 0
        %447 = vmatpush1.bf16.msra.mxu0 0
        %448 = vmatprep.mubr.bf16.mxu0 0
        %449 = vmatmul.mubr.bf16.gmra.mrb[0].mxu0 %v336
        %v450 = vpop.f32.mrb[0].mxu0
        %v451 = vadd.f32 %v271, %v450
        %v452 = vpop.f32.mrb[0].mxu0
        %v453 = vpop.f32.mrb[0].mxu0
        %v454 = vadd.f32 %v271, %v453
        %v455 = vpop.f32.mrb[0].mxu0
        %456 = vmatprep.mubr.bf16.mxu0 0
        %457 = vmatmul.mubr.bf16.gmra.mrb[0].mxu0 %v337
        %v458 = vpop.f32.mrb[0].mxu0
        %v459 = vadd.f32 %v271, %v458
        %v460 = vpop.f32.mrb[0].mxu0
        %v461 = vpop.f32.mrb[0].mxu0
        %v462 = vadd.f32 %v271, %v461
        %v463 = vpop.f32.mrb[0].mxu0
        %464 = vmatprep.mubr.bf16.mxu0 0
        %465 = vmatmul.mubr.bf16.gmra.mrb[0].mxu0 %v338
        %v466 = vpop.f32.mrb[0].mxu0
        %v467 = vadd.f32 %v271, %v466
        %v468 = vpop.f32.mrb[0].mxu0
        %v469 = vpop.f32.mrb[0].mxu0
        %v470 = vadd.f32 %v271, %v469
        %v471 = vpop.f32.mrb[0].mxu0
        %472 = vmatprep.mubr.bf16.mxu0 0
        %473 = vmatmul.mubr.bf16.gmra.mrb[0].mxu0 %v339
        %v474 = vpop.f32.mrb[0].mxu0
        %v475 = vadd.f32 %v271, %v474
        %v476 = vpop.f32.mrb[0].mxu0
        %v477 = vpop.f32.mrb[0].mxu0
        %v478 = vadd.f32 %v271, %v477
        %v479 = vpop.f32.mrb[0].mxu0
        %480 = vmatprep.mubr.bf16.mxu0 0
        %481 = vmatmul.mubr.bf16.gmra.mrb[0].mxu0 %v340
        %v482 = vpop.f32.mrb[0].mxu0
        %v483 = vadd.f32 %v271, %v482
        %v484 = vpop.f32.mrb[0].mxu0
        %v485 = vpop.f32.mrb[0].mxu0
        %v486 = vadd.f32 %v271, %v485
        %v487 = vpop.f32.mrb[0].mxu0
        %488 = vmatprep.mubr.bf16.mxu0 0
        %489 = vmatmul.mubr.bf16.gmra.mrb[0].mxu0 %v341
        %v490 = vpop.f32.mrb[0].mxu0
        %v491 = vadd.f32 %v271, %v490
        %v492 = vpop.f32.mrb[0].mxu0
        %v493 = vpop.f32.mrb[0].mxu0
        %v494 = vadd.f32 %v271, %v493
        %v495 = vpop.f32.mrb[0].mxu0
        %496 = vmatprep.mubr.bf16.mxu0 0
        %497 = vmatmul.mubr.bf16.gmra.mrb[0].mxu0 %v342
        %v498 = vpop.f32.mrb[0].mxu0
        %v499 = vadd.f32 %v271, %v498
        %v500 = vpop.f32.mrb[0].mxu0
        %v501 = vpop.f32.mrb[0].mxu0
        %v502 = vadd.f32 %v271, %v501
        %v503 = vpop.f32.mrb[0].mxu0
        %504 = vmatprep.mubr.bf16.mxu0 0
        %505 = vmatmul.mubr.bf16.gmra.mrb[0].mxu0 %v343
        %v506 = vpop.f32.mrb[0].mxu0
        %v507 = vadd.f32 %v271, %v506
        %v508 = vpop.f32.mrb[0].mxu0
        %v509 = vpop.f32.mrb[0].mxu0
        %v510 = vadd.f32 %v271, %v509
        %v511 = vpop.f32.mrb[0].mxu0
        %512 = vmatprep.mubr.bf16.mxu0 0
        %513 = vmatmul.mubr.bf16.gmra.mrb[0].mxu0 %v344
        %v514 = vpop.f32.mrb[0].mxu0
        %v515 = vadd.f32 %v271, %v514
        %v516 = vpop.f32.mrb[0].mxu0
        %v517 = vpop.f32.mrb[0].mxu0
        %v518 = vadd.f32 %v271, %v517
        %v519 = vpop.f32.mrb[0].mxu0
        %520 = vmatprep.mubr.bf16.mxu0 0
        %521 = vmatmul.mubr.bf16.gmra.mrb[0].mxu0 %v345
        %v522 = vpop.f32.mrb[0].mxu0
        %v523 = vadd.f32 %v271, %v522
        %v524 = vpop.f32.mrb[0].mxu0
        %v525 = vpop.f32.mrb[0].mxu0
        %v526 = vadd.f32 %v271, %v525
        %v527 = vpop.f32.mrb[0].mxu0
        %528 = vmatprep.mubr.bf16.mxu0 0
        %529 = vmatmul.mubr.bf16.gmra.mrb[0].mxu0 %v346
        %v530 = vpop.f32.mrb[0].mxu0
        %v531 = vadd.f32 %v271, %v530
        %v532 = vpop.f32.mrb[0].mxu0
        %v533 = vpop.f32.mrb[0].mxu0
        %v534 = vadd.f32 %v271, %v533
        %v535 = vpop.f32.mrb[0].mxu0
        %536 = vmatprep.mubr.bf16.mxu0 0
        %537 = vmatmul.mubr.bf16.gmra.mrb[0].mxu0 %v347
        %v538 = vpop.f32.mrb[0].mxu0
        %v539 = vadd.f32 %v271, %v538
        %v540 = vpop.f32.mrb[0].mxu0
        %v541 = vpop.f32.mrb[0].mxu0
        %v542 = vadd.f32 %v271, %v541
        %v543 = vpop.f32.mrb[0].mxu0
        %544 = vmatprep.mubr.bf16.mxu0 0
        %545 = vmatmul.mubr.bf16.gmra.mrb[0].mxu0 %v348
        %v546 = vpop.f32.mrb[0].mxu0
        %v547 = vadd.f32 %v271, %v546
        %v548 = vpop.f32.mrb[0].mxu0
        %v549 = vpop.f32.mrb[0].mxu0
        %v550 = vadd.f32 %v271, %v549
        %v551 = vpop.f32.mrb[0].mxu0
        %552 = vmatprep.mubr.bf16.mxu0 0
        %553 = vmatmul.mubr.bf16.gmra.mrb[0].mxu0 %v349
        %v554 = vpop.f32.mrb[0].mxu0
        %v555 = vadd.f32 %v271, %v554
        %v556 = vpop.f32.mrb[0].mxu0
        %v557 = vpop.f32.mrb[0].mxu0
        %v558 = vadd.f32 %v271, %v557
        %v559 = vpop.f32.mrb[0].mxu0
        %560 = vmatprep.mubr.bf16.mxu0 0
        %561 = vmatmul.mubr.bf16.gmra.mrb[0].mxu0 %v350
        %v562 = vpop.f32.mrb[0].mxu0
        %v563 = vadd.f32 %v271, %v562
        %v564 = vpop.f32.mrb[0].mxu0
        %v565 = vpop.f32.mrb[0].mxu0
        %v566 = vadd.f32 %v271, %v565
        %v567 = vpop.f32.mrb[0].mxu0
        %568 = vmatprep.mubr.bf16.mxu0 0
        %569 = vmatmul.mubr.bf16.gmra.mrb[0].mxu0 %v351
        %v570 = vpop.f32.mrb[0].mxu0
        %v571 = vadd.f32 %v271, %v570
        %v572 = vpop.f32.mrb[0].mxu0
        %v573 = vpop.f32.mrb[0].mxu0
        %v574 = vadd.f32 %v271, %v573
        %v575 = vpop.f32.mrb[0].mxu0
        %576 = vdwg.mxu0
        %v577 = vtanh.pop %v451
        %v578 = vtanh.pop %v454
        %v579 = vtanh.pop %v459
        %v580 = vtanh.pop %v462
        %v581 = vtanh.pop %v467
        %v582 = vtanh.pop %v470
        %v583 = vtanh.pop %v475
        %v584 = vtanh.pop %v478
        %v585 = vtanh.pop %v483
        %v586 = vtanh.pop %v486
        %v587 = vtanh.pop %v491
        %v588 = vtanh.pop %v494
        %v589 = vtanh.pop %v499
        %v590 = vtanh.pop %v502
        %v591 = vtanh.pop %v507
        %v592 = vtanh.pop %v510
        %v593 = vtanh.pop %v515
        %v594 = vtanh.pop %v518
        %v595 = vtanh.pop %v523
        %v596 = vtanh.pop %v526
        %v597 = vtanh.pop %v531
        %v598 = vtanh.pop %v534
        %v599 = vtanh.pop %v539
        %v600 = vtanh.pop %v542
        %v601 = vtanh.pop %v547
        %v602 = vtanh.pop %v550
        %v603 = vtanh.pop %v555
        %v604 = vtanh.pop %v558
        %v605 = vtanh.pop %v563
        %v606 = vtanh.pop %v566
        %v607 = vtanh.pop %v571
        %v608 = vtanh.pop %v574
        %v609 = vpack.c.bf16 %v578, %v577
        %v610 = vpack.c.bf16 %v580, %v579
        %v611 = vpack.c.bf16 %v582, %v581
        %v612 = vpack.c.bf16 %v584, %v583
        %v613 = vpack.c.bf16 %v586, %v585
        %v614 = vpack.c.bf16 %v588, %v587
        %v615 = vpack.c.bf16 %v590, %v589
        %v616 = vpack.c.bf16 %v592, %v591
        %v617 = vpack.c.bf16 %v594, %v593
        %v618 = vpack.c.bf16 %v596, %v595
        %v619 = vpack.c.bf16 %v598, %v597
        %v620 = vpack.c.bf16 %v600, %v599
        %v621 = vpack.c.bf16 %v602, %v601
        %v622 = vpack.c.bf16 %v604, %v603
        %v623 = vpack.c.bf16 %v606, %v605
        %v624 = vpack.c.bf16 %v608, %v607
        %s625 = scalar_lea.vmem [#allocation5], 64
        %v626 = vld [vmem:[%s625] sm:$0xf]
        %v627 = vld [vmem:[%s625 + $0x4] sm:$0xf]
        %v628 = vld [vmem:[%s625 + $0x8] sm:$0xf]
        %v629 = vld [vmem:[%s625 + $0xc] sm:$0xf]
        %v630 = vld [vmem:[%s625 + $0x10] sm:$0xf]
        %v631 = vld [vmem:[%s625 + $0x14] sm:$0xf]
        %v632 = vld [vmem:[%s625 + $0x18] sm:$0xf]
        %v633 = vld [vmem:[%s625 + $0x1c] sm:$0xf]
        %v634 = vld [vmem:[%s625 + $0x20] sm:$0xf]
        %v635 = vld [vmem:[%s625 + $0x24] sm:$0xf]
        %v636 = vld [vmem:[%s625 + $0x28] sm:$0xf]
        %v637 = vld [vmem:[%s625 + $0x2c] sm:$0xf]
        %v638 = vld [vmem:[%s625 + $0x30] sm:$0xf]
        %v639 = vld [vmem:[%s625 + $0x34] sm:$0xf]
        %v640 = vld [vmem:[%s625 + $0x38] sm:$0xf]
        %v641 = vld [vmem:[%s625 + $0x3c] sm:$0xf]
        %v642 = vld [vmem:[#allocation7 + $0x1] sm:$0x1]
        %v643 = vlaneseq
        %v644 = vshrl.u32 %v643, 7
        %v645 = vsub.s32 0, %v644
        %v646 = vrot.slane %v642, %v645
        %v663 = vunpack.c.l.b16 %v626
        %v664 = vunpack.c.l.b16 %v627
        %v665 = vunpack.c.l.b16 %v628
        %v666 = vunpack.c.l.b16 %v629
        %v667 = vunpack.c.l.b16 %v630
        %v668 = vunpack.c.l.b16 %v631
        %v669 = vunpack.c.l.b16 %v632
        %v670 = vunpack.c.l.b16 %v633
        %v671 = vunpack.c.l.b16 %v634
        %v672 = vunpack.c.l.b16 %v635
        %v673 = vunpack.c.l.b16 %v636
        %v674 = vunpack.c.l.b16 %v637
        %v675 = vunpack.c.l.b16 %v638
        %v676 = vunpack.c.l.b16 %v639
        %v677 = vunpack.c.l.b16 %v640
        %v678 = vunpack.c.l.b16 %v641
        %v679 = vpack.c.b16 %v664, %v663
        %v680 = vpack.c.b16 %v666, %v665
        %v681 = vpack.c.b16 %v668, %v667
        %v682 = vpack.c.b16 %v670, %v669
        %v683 = vpack.c.b16 %v672, %v671
        %v684 = vpack.c.b16 %v674, %v673
        %v685 = vpack.c.b16 %v676, %v675
        %v686 = vpack.c.b16 %v678, %v677
        %695 = vmatprep.subr.bf16.mxu0 0
        %696 = vmatpush1.bf16.msra.mxu0 %v679
        %697 = vmatprep.subr.bf16.mxu0 0
        %698 = vmatpush1.bf16.msra.mxu0 %v680
        %699 = vmatprep.subr.bf16.mxu0 0
        %700 = vmatpush1.bf16.msra.mxu0 %v681
        %701 = vmatprep.subr.bf16.mxu0 0
        %702 = vmatpush1.bf16.msra.mxu0 %v682
        %703 = vmatprep.subr.bf16.mxu0 0
        %704 = vmatpush1.bf16.msra.mxu0 %v683
        %705 = vmatprep.subr.bf16.mxu0 0
        %706 = vmatpush1.bf16.msra.mxu0 %v684
        %707 = vmatprep.subr.bf16.mxu0 0
        %708 = vmatpush1.bf16.msra.mxu0 %v685
        %709 = vmatprep.subr.bf16.mxu0 0
        %710 = vmatpush1.bf16.msra.mxu0 %v686
        %711 = vmatprep.subr.bf16.mxu0 0
        %712 = vmatpush1.bf16.msra.mxu0 0
        %713 = vmatprep.subr.bf16.mxu0 0
        %714 = vmatpush1.bf16.msra.mxu0 0
        %715 = vmatprep.subr.bf16.mxu0 0
        %716 = vmatpush1.bf16.msra.mxu0 0
        %717 = vmatprep.subr.bf16.mxu0 0
        %718 = vmatpush1.bf16.msra.mxu0 0
        %719 = vmatprep.subr.bf16.mxu0 0
        %720 = vmatpush1.bf16.msra.mxu0 0
        %721 = vmatprep.subr.bf16.mxu0 0
        %722 = vmatpush1.bf16.msra.mxu0 0
        %723 = vmatprep.subr.bf16.mxu0 0
        %724 = vmatpush1.bf16.msra.mxu0 0
        %725 = vmatprep.subr.bf16.mxu0 0
        %726 = vmatpush1.bf16.msra.mxu0 0
        %727 = vmatprep.mubr.bf16.mxu0 0
        %728 = vmatmul.mubr.bf16.gmra.mrb[0].mxu0 %v609
        %v729 = vpop.f32.mrb[0].mxu0
        %v730 = vadd.f32 %v646, %v729
        %v731 = vpop.f32.mrb[0].mxu0
        %v732 = vpop.f32.mrb[0].mxu0
        %v733 = vadd.f32 %v646, %v732
        %v734 = vpop.f32.mrb[0].mxu0
        %735 = vmatprep.mubr.bf16.mxu0 0
        %736 = vmatmul.mubr.bf16.gmra.mrb[0].mxu0 %v610
        %v737 = vpop.f32.mrb[0].mxu0
        %v738 = vadd.f32 %v646, %v737
        %v739 = vpop.f32.mrb[0].mxu0
        %v740 = vpop.f32.mrb[0].mxu0
        %v741 = vadd.f32 %v646, %v740
        %v742 = vpop.f32.mrb[0].mxu0
        %743 = vmatprep.mubr.bf16.mxu0 0
        %744 = vmatmul.mubr.bf16.gmra.mrb[0].mxu0 %v611
        %v745 = vpop.f32.mrb[0].mxu0
        %v746 = vadd.f32 %v646, %v745
        %v747 = vpop.f32.mrb[0].mxu0
        %v748 = vpop.f32.mrb[0].mxu0
        %v749 = vadd.f32 %v646, %v748
        %v750 = vpop.f32.mrb[0].mxu0
        %751 = vmatprep.mubr.bf16.mxu0 0
        %752 = vmatmul.mubr.bf16.gmra.mrb[0].mxu0 %v612
        %v753 = vpop.f32.mrb[0].mxu0
        %v754 = vadd.f32 %v646, %v753
        %v755 = vpop.f32.mrb[0].mxu0
        %v756 = vpop.f32.mrb[0].mxu0
        %v757 = vadd.f32 %v646, %v756
        %v758 = vpop.f32.mrb[0].mxu0
        %759 = vmatprep.mubr.bf16.mxu0 0
        %760 = vmatmul.mubr.bf16.gmra.mrb[0].mxu0 %v613
        %v761 = vpop.f32.mrb[0].mxu0
        %v762 = vadd.f32 %v646, %v761
        %v763 = vpop.f32.mrb[0].mxu0
        %v764 = vpop.f32.mrb[0].mxu0
        %v765 = vadd.f32 %v646, %v764
        %v766 = vpop.f32.mrb[0].mxu0
        %767 = vmatprep.mubr.bf16.mxu0 0
        %768 = vmatmul.mubr.bf16.gmra.mrb[0].mxu0 %v614
        %v769 = vpop.f32.mrb[0].mxu0
        %v770 = vadd.f32 %v646, %v769
        %v771 = vpop.f32.mrb[0].mxu0
        %v772 = vpop.f32.mrb[0].mxu0
        %v773 = vadd.f32 %v646, %v772
        %v774 = vpop.f32.mrb[0].mxu0
        %775 = vmatprep.mubr.bf16.mxu0 0
        %776 = vmatmul.mubr.bf16.gmra.mrb[0].mxu0 %v615
        %v777 = vpop.f32.mrb[0].mxu0
        %v778 = vadd.f32 %v646, %v777
        %v779 = vpop.f32.mrb[0].mxu0
        %v780 = vpop.f32.mrb[0].mxu0
        %v781 = vadd.f32 %v646, %v780
        %v782 = vpop.f32.mrb[0].mxu0
        %783 = vmatprep.mubr.bf16.mxu0 0
        %784 = vmatmul.mubr.bf16.gmra.mrb[0].mxu0 %v616
        %v785 = vpop.f32.mrb[0].mxu0
        %v786 = vadd.f32 %v646, %v785
        %v787 = vpop.f32.mrb[0].mxu0
        %v788 = vpop.f32.mrb[0].mxu0
        %v789 = vadd.f32 %v646, %v788
        %v790 = vpop.f32.mrb[0].mxu0
        %791 = vmatprep.mubr.bf16.mxu0 0
        %792 = vmatmul.mubr.bf16.gmra.mrb[0].mxu0 %v617
        %v793 = vpop.f32.mrb[0].mxu0
        %v794 = vadd.f32 %v646, %v793
        %v795 = vpop.f32.mrb[0].mxu0
        %v796 = vpop.f32.mrb[0].mxu0
        %v797 = vadd.f32 %v646, %v796
        %v798 = vpop.f32.mrb[0].mxu0
        %799 = vmatprep.mubr.bf16.mxu0 0
        %800 = vmatmul.mubr.bf16.gmra.mrb[0].mxu0 %v618
        %v801 = vpop.f32.mrb[0].mxu0
        %v802 = vadd.f32 %v646, %v801
        %v803 = vpop.f32.mrb[0].mxu0
        %v804 = vpop.f32.mrb[0].mxu0
        %v805 = vadd.f32 %v646, %v804
        %v806 = vpop.f32.mrb[0].mxu0
        %807 = vmatprep.mubr.bf16.mxu0 0
        %808 = vmatmul.mubr.bf16.gmra.mrb[0].mxu0 %v619
        %v809 = vpop.f32.mrb[0].mxu0
        %v810 = vadd.f32 %v646, %v809
        %v811 = vpop.f32.mrb[0].mxu0
        %v812 = vpop.f32.mrb[0].mxu0
        %v813 = vadd.f32 %v646, %v812
        %v814 = vpop.f32.mrb[0].mxu0
        %815 = vmatprep.mubr.bf16.mxu0 0
        %816 = vmatmul.mubr.bf16.gmra.mrb[0].mxu0 %v620
        %v817 = vpop.f32.mrb[0].mxu0
        %v818 = vadd.f32 %v646, %v817
        %v819 = vpop.f32.mrb[0].mxu0
        %v820 = vpop.f32.mrb[0].mxu0
        %v821 = vadd.f32 %v646, %v820
        %v822 = vpop.f32.mrb[0].mxu0
        %823 = vmatprep.mubr.bf16.mxu0 0
        %824 = vmatmul.mubr.bf16.gmra.mrb[0].mxu0 %v621
        %v825 = vpop.f32.mrb[0].mxu0
        %v826 = vadd.f32 %v646, %v825
        %v827 = vpop.f32.mrb[0].mxu0
        %v828 = vpop.f32.mrb[0].mxu0
        %v829 = vadd.f32 %v646, %v828
        %v830 = vpop.f32.mrb[0].mxu0
        %831 = vmatprep.mubr.bf16.mxu0 0
        %832 = vmatmul.mubr.bf16.gmra.mrb[0].mxu0 %v622
        %v833 = vpop.f32.mrb[0].mxu0
        %v834 = vadd.f32 %v646, %v833
        %v835 = vpop.f32.mrb[0].mxu0
        %v836 = vpop.f32.mrb[0].mxu0
        %v837 = vadd.f32 %v646, %v836
        %v838 = vpop.f32.mrb[0].mxu0
        %839 = vmatprep.mubr.bf16.mxu0 0
        %840 = vmatmul.mubr.bf16.gmra.mrb[0].mxu0 %v623
        %v841 = vpop.f32.mrb[0].mxu0
        %v842 = vadd.f32 %v646, %v841
        %v843 = vpop.f32.mrb[0].mxu0
        %v844 = vpop.f32.mrb[0].mxu0
        %v845 = vadd.f32 %v646, %v844
        %v846 = vpop.f32.mrb[0].mxu0
        %847 = vmatprep.mubr.bf16.mxu0 0
        %848 = vmatmul.mubr.bf16.gmra.mrb[0].mxu0 %v624
        %v849 = vpop.f32.mrb[0].mxu0
        %v850 = vadd.f32 %v646, %v849
        %v851 = vpop.f32.mrb[0].mxu0
        %v852 = vpop.f32.mrb[0].mxu0
        %v853 = vadd.f32 %v646, %v852
        %v854 = vpop.f32.mrb[0].mxu0
        %855 = vdwg.mxu0
        %v856 = vtanh.pop %v730
        %v857 = vtanh.pop %v733
        %v858 = vtanh.pop %v738
        %v859 = vtanh.pop %v741
        %v860 = vtanh.pop %v746
        %v861 = vtanh.pop %v749
        %v862 = vtanh.pop %v754
        %v863 = vtanh.pop %v757
        %v864 = vtanh.pop %v762
        %v865 = vtanh.pop %v765
        %v866 = vtanh.pop %v770
        %v867 = vtanh.pop %v773
        %v868 = vtanh.pop %v778
        %v869 = vtanh.pop %v781
        %v870 = vtanh.pop %v786
        %v871 = vtanh.pop %v789
        %v872 = vtanh.pop %v794
        %v873 = vtanh.pop %v797
        %v874 = vtanh.pop %v802
        %v875 = vtanh.pop %v805
        %v876 = vtanh.pop %v810
        %v877 = vtanh.pop %v813
        %v878 = vtanh.pop %v818
        %v879 = vtanh.pop %v821
        %v880 = vtanh.pop %v826
        %v881 = vtanh.pop %v829
        %v882 = vtanh.pop %v834
        %v883 = vtanh.pop %v837
        %v884 = vtanh.pop %v842
        %v885 = vtanh.pop %v845
        %v886 = vtanh.pop %v850
        %v887 = vtanh.pop %v853
        %v888 = vpack.c.bf16 %v857, %v856
        %v889 = vpack.c.bf16 %v859, %v858
        %v890 = vpack.c.bf16 %v861, %v860
        %v891 = vpack.c.bf16 %v863, %v862
        %v892 = vpack.c.bf16 %v865, %v864
        %v893 = vpack.c.bf16 %v867, %v866
        %v894 = vpack.c.bf16 %v869, %v868
        %v895 = vpack.c.bf16 %v871, %v870
        %v896 = vpack.c.bf16 %v873, %v872
        %v897 = vpack.c.bf16 %v875, %v874
        %v898 = vpack.c.bf16 %v877, %v876
        %v899 = vpack.c.bf16 %v879, %v878
        %v900 = vpack.c.bf16 %v881, %v880
        %v901 = vpack.c.bf16 %v883, %v882
        %v902 = vpack.c.bf16 %v885, %v884
        %v903 = vpack.c.bf16 %v887, %v886
        %s904 = scalar_lea.vmem [#allocation5], 128
        %v905 = vld [vmem:[%s904] sm:$0xf]
        %v906 = vld [vmem:[%s904 + $0x4] sm:$0xf]
        %v907 = vld [vmem:[%s904 + $0x8] sm:$0xf]
        %v908 = vld [vmem:[%s904 + $0xc] sm:$0xf]
        %v909 = vld [vmem:[%s904 + $0x10] sm:$0xf]
        %v910 = vld [vmem:[%s904 + $0x14] sm:$0xf]
        %v911 = vld [vmem:[%s904 + $0x18] sm:$0xf]
        %v912 = vld [vmem:[%s904 + $0x1c] sm:$0xf]
        %v913 = vld [vmem:[%s904 + $0x20] sm:$0xf]
        %v914 = vld [vmem:[%s904 + $0x24] sm:$0xf]
        %v915 = vld [vmem:[%s904 + $0x28] sm:$0xf]
        %v916 = vld [vmem:[%s904 + $0x2c] sm:$0xf]
        %v917 = vld [vmem:[%s904 + $0x30] sm:$0xf]
        %v918 = vld [vmem:[%s904 + $0x34] sm:$0xf]
        %v919 = vld [vmem:[%s904 + $0x38] sm:$0xf]
        %v920 = vld [vmem:[%s904 + $0x3c] sm:$0xf]
        %v921 = vld [vmem:[#allocation7 + $0x2] sm:$0x1]
        %v922 = vlaneseq
        %v923 = vshrl.u32 %v922, 7
        %v924 = vsub.s32 0, %v923
        %v925 = vrot.slane %v921, %v924
        %v942 = vunpack.c.l.b16 %v905
        %v943 = vunpack.c.l.b16 %v906
        %v944 = vunpack.c.l.b16 %v907
        %v945 = vunpack.c.l.b16 %v908
        %v946 = vunpack.c.l.b16 %v909
        %v947 = vunpack.c.l.b16 %v910
        %v948 = vunpack.c.l.b16 %v911
        %v949 = vunpack.c.l.b16 %v912
        %v950 = vunpack.c.l.b16 %v913
        %v951 = vunpack.c.l.b16 %v914
        %v952 = vunpack.c.l.b16 %v915
        %v953 = vunpack.c.l.b16 %v916
        %v954 = vunpack.c.l.b16 %v917
        %v955 = vunpack.c.l.b16 %v918
        %v956 = vunpack.c.l.b16 %v919
        %v957 = vunpack.c.l.b16 %v920
        %v958 = vpack.c.b16 %v943, %v942
        %v959 = vpack.c.b16 %v945, %v944
        %v960 = vpack.c.b16 %v947, %v946
        %v961 = vpack.c.b16 %v949, %v948
        %v962 = vpack.c.b16 %v951, %v950
        %v963 = vpack.c.b16 %v953, %v952
        %v964 = vpack.c.b16 %v955, %v954
        %v965 = vpack.c.b16 %v957, %v956
        %974 = vmatprep.subr.bf16.mxu0 0
        %975 = vmatpush1.bf16.msra.mxu0 %v958
        %976 = vmatprep.subr.bf16.mxu0 0
        %977 = vmatpush1.bf16.msra.mxu0 %v959
        %978 = vmatprep.subr.bf16.mxu0 0
        %979 = vmatpush1.bf16.msra.mxu0 %v960
        %980 = vmatprep.subr.bf16.mxu0 0
        %981 = vmatpush1.bf16.msra.mxu0 %v961
        %982 = vmatprep.subr.bf16.mxu0 0
        %983 = vmatpush1.bf16.msra.mxu0 %v962
        %984 = vmatprep.subr.bf16.mxu0 0
        %985 = vmatpush1.bf16.msra.mxu0 %v963
        %986 = vmatprep.subr.bf16.mxu0 0
        %987 = vmatpush1.bf16.msra.mxu0 %v964
        %988 = vmatprep.subr.bf16.mxu0 0
        %989 = vmatpush1.bf16.msra.mxu0 %v965
        %990 = vmatprep.subr.bf16.mxu0 0
        %991 = vmatpush1.bf16.msra.mxu0 0
        %992 = vmatprep.subr.bf16.mxu0 0
        %993 = vmatpush1.bf16.msra.mxu0 0
        %994 = vmatprep.subr.bf16.mxu0 0
        %995 = vmatpush1.bf16.msra.mxu0 0
        %996 = vmatprep.subr.bf16.mxu0 0
        %997 = vmatpush1.bf16.msra.mxu0 0
        %998 = vmatprep.subr.bf16.mxu0 0
        %999 = vmatpush1.bf16.msra.mxu0 0
        %1000 = vmatprep.subr.bf16.mxu0 0
        %1001 = vmatpush1.bf16.msra.mxu0 0
        %1002 = vmatprep.subr.bf16.mxu0 0
        %1003 = vmatpush1.bf16.msra.mxu0 0
        %1004 = vmatprep.subr.bf16.mxu0 0
        %1005 = vmatpush1.bf16.msra.mxu0 0
        %1006 = vmatprep.mubr.bf16.mxu0 0
        %1007 = vmatmul.mubr.bf16.gmra.mrb[0].mxu0 %v888
        %v1008 = vpop.f32.mrb[0].mxu0
        %v1009 = vadd.f32 %v925, %v1008
        %v1010 = vpop.f32.mrb[0].mxu0
        %v1011 = vpop.f32.mrb[0].mxu0
        %v1012 = vadd.f32 %v925, %v1011
        %v1013 = vpop.f32.mrb[0].mxu0
        %1014 = vmatprep.mubr.bf16.mxu0 0
        %1015 = vmatmul.mubr.bf16.gmra.mrb[0].mxu0 %v889
        %v1016 = vpop.f32.mrb[0].mxu0
        %v1017 = vadd.f32 %v925, %v1016
        %v1018 = vpop.f32.mrb[0].mxu0
        %v1019 = vpop.f32.mrb[0].mxu0
        %v1020 = vadd.f32 %v925, %v1019
        %v1021 = vpop.f32.mrb[0].mxu0
        %1022 = vmatprep.mubr.bf16.mxu0 0
        %1023 = vmatmul.mubr.bf16.gmra.mrb[0].mxu0 %v890
        %v1024 = vpop.f32.mrb[0].mxu0
        %v1025 = vadd.f32 %v925, %v1024
        %v1026 = vpop.f32.mrb[0].mxu0
        %v1027 = vpop.f32.mrb[0].mxu0
        %v1028 = vadd.f32 %v925, %v1027
        %v1029 = vpop.f32.mrb[0].mxu0
        %1030 = vmatprep.mubr.bf16.mxu0 0
        %1031 = vmatmul.mubr.bf16.gmra.mrb[0].mxu0 %v891
        %v1032 = vpop.f32.mrb[0].mxu0
        %v1033 = vadd.f32 %v925, %v1032
        %v1034 = vpop.f32.mrb[0].mxu0
        %v1035 = vpop.f32.mrb[0].mxu0
        %v1036 = vadd.f32 %v925, %v1035
        %v1037 = vpop.f32.mrb[0].mxu0
        %1038 = vmatprep.mubr.bf16.mxu0 0
        %1039 = vmatmul.mubr.bf16.gmra.mrb[0].mxu0 %v892
        %v1040 = vpop.f32.mrb[0].mxu0
        %v1041 = vadd.f32 %v925, %v1040
        %v1042 = vpop.f32.mrb[0].mxu0
        %v1043 = vpop.f32.mrb[0].mxu0
        %v1044 = vadd.f32 %v925, %v1043
        %v1045 = vpop.f32.mrb[0].mxu0
        %1046 = vmatprep.mubr.bf16.mxu0 0
        %1047 = vmatmul.mubr.bf16.gmra.mrb[0].mxu0 %v893
        %v1048 = vpop.f32.mrb[0].mxu0
        %v1049 = vadd.f32 %v925, %v1048
        %v1050 = vpop.f32.mrb[0].mxu0
        %v1051 = vpop.f32.mrb[0].mxu0
        %v1052 = vadd.f32 %v925, %v1051
        %v1053 = vpop.f32.mrb[0].mxu0
        %1054 = vmatprep.mubr.bf16.mxu0 0
        %1055 = vmatmul.mubr.bf16.gmra.mrb[0].mxu0 %v894
        %v1056 = vpop.f32.mrb[0].mxu0
        %v1057 = vadd.f32 %v925, %v1056
        %v1058 = vpop.f32.mrb[0].mxu0
        %v1059 = vpop.f32.mrb[0].mxu0
        %v1060 = vadd.f32 %v925, %v1059
        %v1061 = vpop.f32.mrb[0].mxu0
        %1062 = vmatprep.mubr.bf16.mxu0 0
        %1063 = vmatmul.mubr.bf16.gmra.mrb[0].mxu0 %v895
        %v1064 = vpop.f32.mrb[0].mxu0
        %v1065 = vadd.f32 %v925, %v1064
        %v1066 = vpop.f32.mrb[0].mxu0
        %v1067 = vpop.f32.mrb[0].mxu0
        %v1068 = vadd.f32 %v925, %v1067
        %v1069 = vpop.f32.mrb[0].mxu0
        %1070 = vmatprep.mubr.bf16.mxu0 0
        %1071 = vmatmul.mubr.bf16.gmra.mrb[0].mxu0 %v896
        %v1072 = vpop.f32.mrb[0].mxu0
        %v1073 = vadd.f32 %v925, %v1072
        %v1074 = vpop.f32.mrb[0].mxu0
        %v1075 = vpop.f32.mrb[0].mxu0
        %v1076 = vadd.f32 %v925, %v1075
        %v1077 = vpop.f32.mrb[0].mxu0
        %1078 = vmatprep.mubr.bf16.mxu0 0
        %1079 = vmatmul.mubr.bf16.gmra.mrb[0].mxu0 %v897
        %v1080 = vpop.f32.mrb[0].mxu0
        %v1081 = vadd.f32 %v925, %v1080
        %v1082 = vpop.f32.mrb[0].mxu0
        %v1083 = vpop.f32.mrb[0].mxu0
        %v1084 = vadd.f32 %v925, %v1083
        %v1085 = vpop.f32.mrb[0].mxu0
        %1086 = vmatprep.mubr.bf16.mxu0 0
        %1087 = vmatmul.mubr.bf16.gmra.mrb[0].mxu0 %v898
        %v1088 = vpop.f32.mrb[0].mxu0
        %v1089 = vadd.f32 %v925, %v1088
        %v1090 = vpop.f32.mrb[0].mxu0
        %v1091 = vpop.f32.mrb[0].mxu0
        %v1092 = vadd.f32 %v925, %v1091
        %v1093 = vpop.f32.mrb[0].mxu0
        %1094 = vmatprep.mubr.bf16.mxu0 0
        %1095 = vmatmul.mubr.bf16.gmra.mrb[0].mxu0 %v899
        %v1096 = vpop.f32.mrb[0].mxu0
        %v1097 = vadd.f32 %v925, %v1096
        %v1098 = vpop.f32.mrb[0].mxu0
        %v1099 = vpop.f32.mrb[0].mxu0
        %v1100 = vadd.f32 %v925, %v1099
        %v1101 = vpop.f32.mrb[0].mxu0
        %1102 = vmatprep.mubr.bf16.mxu0 0
        %1103 = vmatmul.mubr.bf16.gmra.mrb[0].mxu0 %v900
        %v1104 = vpop.f32.mrb[0].mxu0
        %v1105 = vadd.f32 %v925, %v1104
        %v1106 = vpop.f32.mrb[0].mxu0
        %v1107 = vpop.f32.mrb[0].mxu0
        %v1108 = vadd.f32 %v925, %v1107
        %v1109 = vpop.f32.mrb[0].mxu0
        %1110 = vmatprep.mubr.bf16.mxu0 0
        %1111 = vmatmul.mubr.bf16.gmra.mrb[0].mxu0 %v901
        %v1112 = vpop.f32.mrb[0].mxu0
        %v1113 = vadd.f32 %v925, %v1112
        %v1114 = vpop.f32.mrb[0].mxu0
        %v1115 = vpop.f32.mrb[0].mxu0
        %v1116 = vadd.f32 %v925, %v1115
        %v1117 = vpop.f32.mrb[0].mxu0
        %1118 = vmatprep.mubr.bf16.mxu0 0
        %1119 = vmatmul.mubr.bf16.gmra.mrb[0].mxu0 %v902
        %v1120 = vpop.f32.mrb[0].mxu0
        %v1121 = vadd.f32 %v925, %v1120
        %v1122 = vpop.f32.mrb[0].mxu0
        %v1123 = vpop.f32.mrb[0].mxu0
        %v1124 = vadd.f32 %v925, %v1123
        %v1125 = vpop.f32.mrb[0].mxu0
        %1126 = vmatprep.mubr.bf16.mxu0 0
        %1127 = vmatmul.mubr.bf16.gmra.mrb[0].mxu0 %v903
        %v1128 = vpop.f32.mrb[0].mxu0
        %v1129 = vadd.f32 %v925, %v1128
        %v1130 = vpop.f32.mrb[0].mxu0
        %v1131 = vpop.f32.mrb[0].mxu0
        %v1132 = vadd.f32 %v925, %v1131
        %v1133 = vpop.f32.mrb[0].mxu0
        %1134 = vdwg.mxu0
        %v1135 = vlaneseq
        %v1136 = vand.u32 %v1135, 127
        %vm1137 = vcmp.lt.s32.totalorder %v1136, 8
        %v1138 = vunpack.c.l.bf16 %v219
        %v1139 = vunpack.c.l.bf16 %v220
        %v1140 = vunpack.c.l.bf16 %v221
        %v1141 = vunpack.c.l.bf16 %v222
        %v1142 = vunpack.c.l.bf16 %v223
        %v1143 = vunpack.c.l.bf16 %v224
        %v1144 = vunpack.c.l.bf16 %v225
        %v1145 = vunpack.c.l.bf16 %v226
        %v1146 = vunpack.c.l.bf16 %v227
        %v1147 = vunpack.c.l.bf16 %v228
        %v1148 = vunpack.c.l.bf16 %v229
        %v1149 = vunpack.c.l.bf16 %v230
        %v1150 = vunpack.c.l.bf16 %v231
        %v1151 = vunpack.c.l.bf16 %v232
        %v1152 = vunpack.c.l.bf16 %v233
        %v1153 = vunpack.c.l.bf16 %v234
        %v1154 = vunpack.c.l.bf16 %v235
        %v1155 = vunpack.c.l.bf16 %v236
        %v1156 = vunpack.c.l.bf16 %v237
        %v1157 = vunpack.c.l.bf16 %v238
        %v1158 = vunpack.c.l.bf16 %v239
        %v1159 = vunpack.c.l.bf16 %v240
        %v1160 = vunpack.c.l.bf16 %v241
        %v1161 = vunpack.c.l.bf16 %v242
        %v1162 = vunpack.c.l.bf16 %v243
        %v1163 = vunpack.c.l.bf16 %v244
        %v1164 = vunpack.c.l.bf16 %v245
        %v1165 = vunpack.c.l.bf16 %v246
        %v1166 = vunpack.c.l.bf16 %v247
        %v1167 = vunpack.c.l.bf16 %v248
        %v1168 = vunpack.c.l.bf16 %v249
        %v1169 = vunpack.c.l.bf16 %v250
        %v1170 = vsel %vm1137, %v1138, -1000000.0
        %v1171 = vsel %vm1137, %v1139, -1000000.0
        %v1172 = vsel %vm1137, %v1140, -1000000.0
        %v1173 = vsel %vm1137, %v1141, -1000000.0
        %v1174 = vsel %vm1137, %v1142, -1000000.0
        %v1175 = vsel %vm1137, %v1143, -1000000.0
        %v1176 = vsel %vm1137, %v1144, -1000000.0
        %v1177 = vsel %vm1137, %v1145, -1000000.0
        %v1178 = vsel %vm1137, %v1146, -1000000.0
        %v1179 = vsel %vm1137, %v1147, -1000000.0
        %v1180 = vsel %vm1137, %v1148, -1000000.0
        %v1181 = vsel %vm1137, %v1149, -1000000.0
        %v1182 = vsel %vm1137, %v1150, -1000000.0
        %v1183 = vsel %vm1137, %v1151, -1000000.0
        %v1184 = vsel %vm1137, %v1152, -1000000.0
        %v1185 = vsel %vm1137, %v1153, -1000000.0
        %v1186 = vsel %vm1137, %v1154, -1000000.0
        %v1187 = vsel %vm1137, %v1155, -1000000.0
        %v1188 = vsel %vm1137, %v1156, -1000000.0
        %v1189 = vsel %vm1137, %v1157, -1000000.0
        %v1190 = vsel %vm1137, %v1158, -1000000.0
        %v1191 = vsel %vm1137, %v1159, -1000000.0
        %v1192 = vsel %vm1137, %v1160, -1000000.0
        %v1193 = vsel %vm1137, %v1161, -1000000.0
        %v1194 = vsel %vm1137, %v1162, -1000000.0
        %v1195 = vsel %vm1137, %v1163, -1000000.0
        %v1196 = vsel %vm1137, %v1164, -1000000.0
        %v1197 = vsel %vm1137, %v1165, -1000000.0
        %v1198 = vsel %vm1137, %v1166, -1000000.0
        %v1199 = vsel %vm1137, %v1167, -1000000.0
        %v1200 = vsel %vm1137, %v1168, -1000000.0
        %v1201 = vsel %vm1137, %v1169, -1000000.0
        %v1202 = vadd.f32 %v1009, %v1170
        %v1203 = vadd.f32 %v1012, %v1171
        %v1204 = vadd.f32 %v1017, %v1172
        %v1205 = vadd.f32 %v1020, %v1173
        %v1206 = vadd.f32 %v1025, %v1174
        %v1207 = vadd.f32 %v1028, %v1175
        %v1208 = vadd.f32 %v1033, %v1176
        %v1209 = vadd.f32 %v1036, %v1177
        %v1210 = vadd.f32 %v1041, %v1178
        %v1211 = vadd.f32 %v1044, %v1179
        %v1212 = vadd.f32 %v1049, %v1180
        %v1213 = vadd.f32 %v1052, %v1181
        %v1214 = vadd.f32 %v1057, %v1182
        %v1215 = vadd.f32 %v1060, %v1183
        %v1216 = vadd.f32 %v1065, %v1184
        %v1217 = vadd.f32 %v1068, %v1185
        %v1218 = vadd.f32 %v1073, %v1186
        %v1219 = vadd.f32 %v1076, %v1187
        %v1220 = vadd.f32 %v1081, %v1188
        %v1221 = vadd.f32 %v1084, %v1189
        %v1222 = vadd.f32 %v1089, %v1190
        %v1223 = vadd.f32 %v1092, %v1191
        %v1224 = vadd.f32 %v1097, %v1192
        %v1225 = vadd.f32 %v1100, %v1193
        %v1226 = vadd.f32 %v1105, %v1194
        %v1227 = vadd.f32 %v1108, %v1195
        %v1228 = vadd.f32 %v1113, %v1196
        %v1229 = vadd.f32 %v1116, %v1197
        %v1230 = vadd.f32 %v1121, %v1198
        %v1231 = vadd.f32 %v1124, %v1199
        %v1232 = vadd.f32 %v1129, %v1200
        %v1233 = vadd.f32 %v1132, %v1201
        %1234 = vmax.xlane.f32.xlu0 %v1202
        %v1235 = vpop.xlane.xlu0 %1234
        %1236 = vmax.xlane.f32.xlu0 %v1203
        %v1237 = vpop.xlane.xlu0 %1236
        %1238 = vmax.xlane.f32.xlu0 %v1204
        %v1239 = vpop.xlane.xlu0 %1238
        %1240 = vmax.xlane.f32.xlu0 %v1205
        %v1241 = vpop.xlane.xlu0 %1240
        %1242 = vmax.xlane.f32.xlu0 %v1206
        %v1243 = vpop.xlane.xlu0 %1242
        %1244 = vmax.xlane.f32.xlu0 %v1207
        %v1245 = vpop.xlane.xlu0 %1244
        %1246 = vmax.xlane.f32.xlu0 %v1208
        %v1247 = vpop.xlane.xlu0 %1246
        %1248 = vmax.xlane.f32.xlu0 %v1209
        %v1249 = vpop.xlane.xlu0 %1248
        %1250 = vmax.xlane.f32.xlu0 %v1210
        %v1251 = vpop.xlane.xlu0 %1250
        %1252 = vmax.xlane.f32.xlu0 %v1211
        %v1253 = vpop.xlane.xlu0 %1252
        %1254 = vmax.xlane.f32.xlu0 %v1212
        %v1255 = vpop.xlane.xlu0 %1254
        %1256 = vmax.xlane.f32.xlu0 %v1213
        %v1257 = vpop.xlane.xlu0 %1256
        %1258 = vmax.xlane.f32.xlu0 %v1214
        %v1259 = vpop.xlane.xlu0 %1258
        %1260 = vmax.xlane.f32.xlu0 %v1215
        %v1261 = vpop.xlane.xlu0 %1260
        %1262 = vmax.xlane.f32.xlu0 %v1216
        %v1263 = vpop.xlane.xlu0 %1262
        %1264 = vmax.xlane.f32.xlu0 %v1217
        %v1265 = vpop.xlane.xlu0 %1264
        %1266 = vmax.xlane.f32.xlu0 %v1218
        %v1267 = vpop.xlane.xlu0 %1266
        %1268 = vmax.xlane.f32.xlu0 %v1219
        %v1269 = vpop.xlane.xlu0 %1268
        %1270 = vmax.xlane.f32.xlu0 %v1220
        %v1271 = vpop.xlane.xlu0 %1270
        %1272 = vmax.xlane.f32.xlu0 %v1221
        %v1273 = vpop.xlane.xlu0 %1272
        %1274 = vmax.xlane.f32.xlu0 %v1222
        %v1275 = vpop.xlane.xlu0 %1274
        %1276 = vmax.xlane.f32.xlu0 %v1223
        %v1277 = vpop.xlane.xlu0 %1276
        %1278 = vmax.xlane.f32.xlu0 %v1224
        %v1279 = vpop.xlane.xlu0 %1278
        %1280 = vmax.xlane.f32.xlu0 %v1225
        %v1281 = vpop.xlane.xlu0 %1280
        %1282 = vmax.xlane.f32.xlu0 %v1226
        %v1283 = vpop.xlane.xlu0 %1282
        %1284 = vmax.xlane.f32.xlu0 %v1227
        %v1285 = vpop.xlane.xlu0 %1284
        %1286 = vmax.xlane.f32.xlu0 %v1228
        %v1287 = vpop.xlane.xlu0 %1286
        %1288 = vmax.xlane.f32.xlu0 %v1229
        %v1289 = vpop.xlane.xlu0 %1288
        %1290 = vmax.xlane.f32.xlu0 %v1230
        %v1291 = vpop.xlane.xlu0 %1290
        %1292 = vmax.xlane.f32.xlu0 %v1231
        %v1293 = vpop.xlane.xlu0 %1292
        %1294 = vmax.xlane.f32.xlu0 %v1232
        %v1295 = vpop.xlane.xlu0 %1294
        %1296 = vmax.xlane.f32.xlu0 %v1233
        %v1297 = vpop.xlane.xlu0 %1296
        %v1298 = vsub.f32 %v1202, %v1235
        %v1299 = vsub.f32 %v1203, %v1237
        %v1300 = vsub.f32 %v1204, %v1239
        %v1301 = vsub.f32 %v1205, %v1241
        %v1302 = vsub.f32 %v1206, %v1243
        %v1303 = vsub.f32 %v1207, %v1245
        %v1304 = vsub.f32 %v1208, %v1247
        %v1305 = vsub.f32 %v1209, %v1249
        %v1306 = vsub.f32 %v1210, %v1251
        %v1307 = vsub.f32 %v1211, %v1253
        %v1308 = vsub.f32 %v1212, %v1255
        %v1309 = vsub.f32 %v1213, %v1257
        %v1310 = vsub.f32 %v1214, %v1259
        %v1311 = vsub.f32 %v1215, %v1261
        %v1312 = vsub.f32 %v1216, %v1263
        %v1313 = vsub.f32 %v1217, %v1265
        %v1314 = vsub.f32 %v1218, %v1267
        %v1315 = vsub.f32 %v1219, %v1269
        %v1316 = vsub.f32 %v1220, %v1271
        %v1317 = vsub.f32 %v1221, %v1273
        %v1318 = vsub.f32 %v1222, %v1275
        %v1319 = vsub.f32 %v1223, %v1277
        %v1320 = vsub.f32 %v1224, %v1279
        %v1321 = vsub.f32 %v1225, %v1281
        %v1322 = vsub.f32 %v1226, %v1283
        %v1323 = vsub.f32 %v1227, %v1285
        %v1324 = vsub.f32 %v1228, %v1287
        %v1325 = vsub.f32 %v1229, %v1289
        %v1326 = vsub.f32 %v1230, %v1291
        %v1327 = vsub.f32 %v1231, %v1293
        %v1328 = vsub.f32 %v1232, %v1295
        %v1329 = vsub.f32 %v1233, %v1297
        %v1330 = vmul.f32 %v1298, 1.442695
        %v1331 = vpow.pop %v1330
        %v1332 = vmul.f32 %v1299, 1.442695
        %v1333 = vpow.pop %v1332
        %v1334 = vmul.f32 %v1300, 1.442695
        %v1335 = vpow.pop %v1334
        %v1336 = vmul.f32 %v1301, 1.442695
        %v1337 = vpow.pop %v1336
        %v1338 = vmul.f32 %v1302, 1.442695
        %v1339 = vpow.pop %v1338
        %v1340 = vmul.f32 %v1303, 1.442695
        %v1341 = vpow.pop %v1340
        %v1342 = vmul.f32 %v1304, 1.442695
        %v1343 = vpow.pop %v1342
        %v1344 = vmul.f32 %v1305, 1.442695
        %v1345 = vpow.pop %v1344
        %v1346 = vmul.f32 %v1306, 1.442695
        %v1347 = vpow.pop %v1346
        %v1348 = vmul.f32 %v1307, 1.442695
        %v1349 = vpow.pop %v1348
        %v1350 = vmul.f32 %v1308, 1.442695
        %v1351 = vpow.pop %v1350
        %v1352 = vmul.f32 %v1309, 1.442695
        %v1353 = vpow.pop %v1352
        %v1354 = vmul.f32 %v1310, 1.442695
        %v1355 = vpow.pop %v1354
        %v1356 = vmul.f32 %v1311, 1.442695
        %v1357 = vpow.pop %v1356
        %v1358 = vmul.f32 %v1312, 1.442695
        %v1359 = vpow.pop %v1358
        %v1360 = vmul.f32 %v1313, 1.442695
        %v1361 = vpow.pop %v1360
        %v1362 = vmul.f32 %v1314, 1.442695
        %v1363 = vpow.pop %v1362
        %v1364 = vmul.f32 %v1315, 1.442695
        %v1365 = vpow.pop %v1364
        %v1366 = vmul.f32 %v1316, 1.442695
        %v1367 = vpow.pop %v1366
        %v1368 = vmul.f32 %v1317, 1.442695
        %v1369 = vpow.pop %v1368
        %v1370 = vmul.f32 %v1318, 1.442695
        %v1371 = vpow.pop %v1370
        %v1372 = vmul.f32 %v1319, 1.442695
        %v1373 = vpow.pop %v1372
        %v1374 = vmul.f32 %v1320, 1.442695
        %v1375 = vpow.pop %v1374
        %v1376 = vmul.f32 %v1321, 1.442695
        %v1377 = vpow.pop %v1376
        %v1378 = vmul.f32 %v1322, 1.442695
        %v1379 = vpow.pop %v1378
        %v1380 = vmul.f32 %v1323, 1.442695
        %v1381 = vpow.pop %v1380
        %v1382 = vmul.f32 %v1324, 1.442695
        %v1383 = vpow.pop %v1382
        %v1384 = vmul.f32 %v1325, 1.442695
        %v1385 = vpow.pop %v1384
        %v1386 = vmul.f32 %v1326, 1.442695
        %v1387 = vpow.pop %v1386
        %v1388 = vmul.f32 %v1327, 1.442695
        %v1389 = vpow.pop %v1388
        %v1390 = vmul.f32 %v1328, 1.442695
        %v1391 = vpow.pop %v1390
        %v1392 = vmul.f32 %v1329, 1.442695
        %v1393 = vpow.pop %v1392
        %1394 = vadd.xlane.f32.xlu0 %v1331
        %v1395 = vpop.xlane.xlu0 %1394
        %1396 = vadd.xlane.f32.xlu0 %v1333
        %v1397 = vpop.xlane.xlu0 %1396
        %1398 = vadd.xlane.f32.xlu0 %v1335
        %v1399 = vpop.xlane.xlu0 %1398
        %1400 = vadd.xlane.f32.xlu0 %v1337
        %v1401 = vpop.xlane.xlu0 %1400
        %1402 = vadd.xlane.f32.xlu0 %v1339
        %v1403 = vpop.xlane.xlu0 %1402
        %1404 = vadd.xlane.f32.xlu0 %v1341
        %v1405 = vpop.xlane.xlu0 %1404
        %1406 = vadd.xlane.f32.xlu0 %v1343
        %v1407 = vpop.xlane.xlu0 %1406
        %1408 = vadd.xlane.f32.xlu0 %v1345
        %v1409 = vpop.xlane.xlu0 %1408
        %1410 = vadd.xlane.f32.xlu0 %v1347
        %v1411 = vpop.xlane.xlu0 %1410
        %1412 = vadd.xlane.f32.xlu0 %v1349
        %v1413 = vpop.xlane.xlu0 %1412
        %1414 = vadd.xlane.f32.xlu0 %v1351
        %v1415 = vpop.xlane.xlu0 %1414
        %1416 = vadd.xlane.f32.xlu0 %v1353
        %v1417 = vpop.xlane.xlu0 %1416
        %1418 = vadd.xlane.f32.xlu0 %v1355
        %v1419 = vpop.xlane.xlu0 %1418
        %1420 = vadd.xlane.f32.xlu0 %v1357
        %v1421 = vpop.xlane.xlu0 %1420
        %1422 = vadd.xlane.f32.xlu0 %v1359
        %v1423 = vpop.xlane.xlu0 %1422
        %1424 = vadd.xlane.f32.xlu0 %v1361
        %v1425 = vpop.xlane.xlu0 %1424
        %1426 = vadd.xlane.f32.xlu0 %v1363
        %v1427 = vpop.xlane.xlu0 %1426
        %1428 = vadd.xlane.f32.xlu0 %v1365
        %v1429 = vpop.xlane.xlu0 %1428
        %1430 = vadd.xlane.f32.xlu0 %v1367
        %v1431 = vpop.xlane.xlu0 %1430
        %1432 = vadd.xlane.f32.xlu0 %v1369
        %v1433 = vpop.xlane.xlu0 %1432
        %1434 = vadd.xlane.f32.xlu0 %v1371
        %v1435 = vpop.xlane.xlu0 %1434
        %1436 = vadd.xlane.f32.xlu0 %v1373
        %v1437 = vpop.xlane.xlu0 %1436
        %1438 = vadd.xlane.f32.xlu0 %v1375
        %v1439 = vpop.xlane.xlu0 %1438
        %1440 = vadd.xlane.f32.xlu0 %v1377
        %v1441 = vpop.xlane.xlu0 %1440
        %1442 = vadd.xlane.f32.xlu0 %v1379
        %v1443 = vpop.xlane.xlu0 %1442
        %1444 = vadd.xlane.f32.xlu0 %v1381
        %v1445 = vpop.xlane.xlu0 %1444
        %1446 = vadd.xlane.f32.xlu0 %v1383
        %v1447 = vpop.xlane.xlu0 %1446
        %1448 = vadd.xlane.f32.xlu0 %v1385
        %v1449 = vpop.xlane.xlu0 %1448
        %1450 = vadd.xlane.f32.xlu0 %v1387
        %v1451 = vpop.xlane.xlu0 %1450
        %1452 = vadd.xlane.f32.xlu0 %v1389
        %v1453 = vpop.xlane.xlu0 %1452
        %1454 = vadd.xlane.f32.xlu0 %v1391
        %v1455 = vpop.xlane.xlu0 %1454
        %1456 = vadd.xlane.f32.xlu0 %v1393
        %v1457 = vpop.xlane.xlu0 %1456
        %v1458 = vrcp.pop %v1395
        %v1459 = vmul.f32 1.0, %v1458
        %v1460 = vrcp.pop %v1397
        %v1461 = vmul.f32 1.0, %v1460
        %v1462 = vrcp.pop %v1399
        %v1463 = vmul.f32 1.0, %v1462
        %v1464 = vrcp.pop %v1401
        %v1465 = vmul.f32 1.0, %v1464
        %v1466 = vrcp.pop %v1403
        %v1467 = vmul.f32 1.0, %v1466
        %v1468 = vrcp.pop %v1405
        %v1469 = vmul.f32 1.0, %v1468
        %v1470 = vrcp.pop %v1407
        %v1471 = vmul.f32 1.0, %v1470
        %v1472 = vrcp.pop %v1409
        %v1473 = vmul.f32 1.0, %v1472
        %v1474 = vrcp.pop %v1411
        %v1475 = vmul.f32 1.0, %v1474
        %v1476 = vrcp.pop %v1413
        %v1477 = vmul.f32 1.0, %v1476
        %v1478 = vrcp.pop %v1415
        %v1479 = vmul.f32 1.0, %v1478
        %v1480 = vrcp.pop %v1417
        %v1481 = vmul.f32 1.0, %v1480
        %v1482 = vrcp.pop %v1419
        %v1483 = vmul.f32 1.0, %v1482
        %v1484 = vrcp.pop %v1421
        %v1485 = vmul.f32 1.0, %v1484
        %v1486 = vrcp.pop %v1423
        %v1487 = vmul.f32 1.0, %v1486
        %v1488 = vrcp.pop %v1425
        %v1489 = vmul.f32 1.0, %v1488
        %v1490 = vrcp.pop %v1427
        %v1491 = vmul.f32 1.0, %v1490
        %v1492 = vrcp.pop %v1429
        %v1493 = vmul.f32 1.0, %v1492
        %v1494 = vrcp.pop %v1431
        %v1495 = vmul.f32 1.0, %v1494
        %v1496 = vrcp.pop %v1433
        %v1497 = vmul.f32 1.0, %v1496
        %v1498 = vrcp.pop %v1435
        %v1499 = vmul.f32 1.0, %v1498
        %v1500 = vrcp.pop %v1437
        %v1501 = vmul.f32 1.0, %v1500
        %v1502 = vrcp.pop %v1439
        %v1503 = vmul.f32 1.0, %v1502
        %v1504 = vrcp.pop %v1441
        %v1505 = vmul.f32 1.0, %v1504
        %v1506 = vrcp.pop %v1443
        %v1507 = vmul.f32 1.0, %v1506
        %v1508 = vrcp.pop %v1445
        %v1509 = vmul.f32 1.0, %v1508
        %v1510 = vrcp.pop %v1447
        %v1511 = vmul.f32 1.0, %v1510
        %v1512 = vrcp.pop %v1449
        %v1513 = vmul.f32 1.0, %v1512
        %v1514 = vrcp.pop %v1451
        %v1515 = vmul.f32 1.0, %v1514
        %v1516 = vrcp.pop %v1453
        %v1517 = vmul.f32 1.0, %v1516
        %v1518 = vrcp.pop %v1455
        %v1519 = vmul.f32 1.0, %v1518
        %v1520 = vrcp.pop %v1457
        %v1521 = vmul.f32 1.0, %v1520
        %v1522 = vmul.f32 %v1331, %v1459
        %v1523 = vmul.f32 %v1333, %v1461
        %v1524 = vmul.f32 %v1335, %v1463
        %v1525 = vmul.f32 %v1337, %v1465
        %v1526 = vmul.f32 %v1339, %v1467
        %v1527 = vmul.f32 %v1341, %v1469
        %v1528 = vmul.f32 %v1343, %v1471
        %v1529 = vmul.f32 %v1345, %v1473
        %v1530 = vmul.f32 %v1347, %v1475
        %v1531 = vmul.f32 %v1349, %v1477
        %v1532 = vmul.f32 %v1351, %v1479
        %v1533 = vmul.f32 %v1353, %v1481
        %v1534 = vmul.f32 %v1355, %v1483
        %v1535 = vmul.f32 %v1357, %v1485
        %v1536 = vmul.f32 %v1359, %v1487
        %v1537 = vmul.f32 %v1361, %v1489
        %v1538 = vmul.f32 %v1363, %v1491
        %v1539 = vmul.f32 %v1365, %v1493
        %v1540 = vmul.f32 %v1367, %v1495
        %v1541 = vmul.f32 %v1369, %v1497
        %v1542 = vmul.f32 %v1371, %v1499
        %v1543 = vmul.f32 %v1373, %v1501
        %v1544 = vmul.f32 %v1375, %v1503
        %v1545 = vmul.f32 %v1377, %v1505
        %v1546 = vmul.f32 %v1379, %v1507
        %v1547 = vmul.f32 %v1381, %v1509
        %v1548 = vmul.f32 %v1383, %v1511
        %v1549 = vmul.f32 %v1385, %v1513
        %v1550 = vmul.f32 %v1387, %v1515
        %v1551 = vmul.f32 %v1389, %v1517
        %v1552 = vmul.f32 %v1391, %v1519
        %v1553 = vmul.f32 %v1393, %v1521
        %1554 = vst [vmem:[%s215] sm:$0xff] %v1522
        %1555 = vst [vmem:[%s215 + $0x8] sm:$0xff] %v1523
        %1556 = vst [vmem:[%s215 + $0x10] sm:$0xff] %v1524
        %1557 = vst [vmem:[%s215 + $0x18] sm:$0xff] %v1525
        %1558 = vst [vmem:[%s215 + $0x20] sm:$0xff] %v1526
        %1559 = vst [vmem:[%s215 + $0x28] sm:$0xff] %v1527
        %1560 = vst [vmem:[%s215 + $0x30] sm:$0xff] %v1528
        %1561 = vst [vmem:[%s215 + $0x38] sm:$0xff] %v1529
        %1562 = vst [vmem:[%s215 + $0x40] sm:$0xff] %v1530
        %1563 = vst [vmem:[%s215 + $0x48] sm:$0xff] %v1531
        %1564 = vst [vmem:[%s215 + $0x50] sm:$0xff] %v1532
        %1565 = vst [vmem:[%s215 + $0x58] sm:$0xff] %v1533
        %1566 = vst [vmem:[%s215 + $0x60] sm:$0xff] %v1534
        %1567 = vst [vmem:[%s215 + $0x68] sm:$0xff] %v1535
        %1568 = vst [vmem:[%s215 + $0x70] sm:$0xff] %v1536
        %1569 = vst [vmem:[%s215 + $0x78] sm:$0xff] %v1537
        %1570 = vst [vmem:[%s215 + $0x80] sm:$0xff] %v1538
        %1571 = vst [vmem:[%s215 + $0x88] sm:$0xff] %v1539
        %1572 = vst [vmem:[%s215 + $0x90] sm:$0xff] %v1540
        %1573 = vst [vmem:[%s215 + $0x98] sm:$0xff] %v1541
        %1574 = vst [vmem:[%s215 + $0xa0] sm:$0xff] %v1542
        %1575 = vst [vmem:[%s215 + $0xa8] sm:$0xff] %v1543
        %1576 = vst [vmem:[%s215 + $0xb0] sm:$0xff] %v1544
        %1577 = vst [vmem:[%s215 + $0xb8] sm:$0xff] %v1545
        %1578 = vst [vmem:[%s215 + $0xc0] sm:$0xff] %v1546
        %1579 = vst [vmem:[%s215 + $0xc8] sm:$0xff] %v1547
        %1580 = vst [vmem:[%s215 + $0xd0] sm:$0xff] %v1548
        %1581 = vst [vmem:[%s215 + $0xd8] sm:$0xff] %v1549
        %1582 = vst [vmem:[%s215 + $0xe0] sm:$0xff] %v1550
        %1583 = vst [vmem:[%s215 + $0xe8] sm:$0xff] %v1551
        %1584 = vst [vmem:[%s215 + $0xf0] sm:$0xff] %v1552
        %1585 = vst [vmem:[%s215 + $0xf8] sm:$0xff] %v1553
        %s1586 = sand.u32 %s97, 1
        %s1587 = scalar_lea.sflag [#allocation4], %s1586
        %s1588 = sand.u32 %s97, 1
        %s1589 = smul.addr %s1588, 256
        %s1590 = scalar_lea.vmem [#allocation8], %s1589
        // Predicated region
        $region45: #{mlp_agent_forward.1} parent=31 // pred_check
          %p1591 = pneg %p107
        $region46: #{mlp_agent_forward.1} parent=31 // pred_check_branch
          %1593 = sbr.rel (%p1591) target = $region48
        $region47: #{mlp_agent_forward.1} parent=31 // pred_region
          %s1594 = smul.u32 32, %s21
          %s1596 = ssub.s32 4096, 4096
          %1597 = vsyncadd %s1587, %s1596
          %s1598 = smul.addr %s1594, 128
          %s1599 = scalar_lea.hbm %s3, %s1598
          %s1600 = sshll.u32 %s1590, 4
          %s1601 = int_to_ptr.vmem [resolvable:$true] %s1600
          %1606 = dma.vmem_to_hbm [thread:$0]  %s1601, 4096, %s1599, %s1587, 128, 128, 8
        $region48: #{mlp_agent_forward.1} parent=31 // pred_fallthru
          _
      $region32: #{mlp_agent_forward.1} parent=5 // pred_fallthru
        _
      %p1607 = scmp.le.s32.totalorder 2, %s16
      // Predicated region
      $region49: #{mlp_agent_forward.1} parent=5 // pred_check
        %p1608 = pneg %p1607
      $region50: #{mlp_agent_forward.1} parent=5 // pred_check_branch
        %1610 = sbr.rel (%p1608) target = $region52
      $region51: #{mlp_agent_forward.1} parent=5 // pred_region
        %s1611 = ssub.s32 %s16, 2
        // Predicated region
        $region53: #{mlp_agent_forward.1} parent=51 // pred_check
          %p1612 = pneg %p113
        $region54: #{mlp_agent_forward.1} parent=51 // pred_check_branch
          %1614 = sbr.rel (%p1612) target = $region56
        $region55: #{mlp_agent_forward.1} parent=51 // pred_region
          %s1615 = sand.u32 %s98, 1
          %s1616 = scalar_lea.sflag [#allocation4], %s1615
          %s1617 = sand.u32 %s98, 1
          %s1618 = smul.addr %s1617, 256
          %s1619 = scalar_lea.vmem [#allocation8], %s1618
          %1620 = dma.done %s1616, 4096
        $region56: #{mlp_agent_forward.1} parent=51 // pred_fallthru
          _
      $region52: #{mlp_agent_forward.1} parent=5 // pred_fallthru
        _
    $region6: #{mlp_agent_forward.1} parent=1 // loop_footer
      %s20 = sadd.s32 1, %s16
    $region7: #{mlp_agent_forward.1} parent=1 // loop_footer_branch
      %15 = sbr.rel target = $region3
    $region8: #{mlp_agent_forward.1} parent=1 // loop_exit
      _
    %1621 = vsyncpa [#allocation3], 1
    %s1622 = scalar_lea.sflag [#allocation3], 1
    %1623 = vsyncpa %s1622, 1
    %1624 = vsyncpa [#allocation6], 1
    %1625 = vsyncpa [#allocation4], 1
    %s1626 = scalar_lea.sflag [#allocation4], 1
    %1627 = vsyncpa %s1626, 1

</llo_original>
